<compile_context>
chip_gen: v7x
topology: tpu7x:2x2x1
jax: 0.10.0
libtpu: 0.0.40
codegen_flags: <defaults>
</compile_context>

<pallas_src>
import functools
import numpy as np

import jax
import jax.numpy as jnp
from jax import lax
from jax.experimental import pallas as pl
from jax.experimental.pallas import tpu as pltpu


# ----------------------------------------------------------------------------
# Fused per-window kernel
# ----------------------------------------------------------------------------
def _ipow(x, p):
    """Unrolled integer power (focusing_factor <= 6 branch of the reference)."""
    r = x
    for _ in range(int(p) - 1):
        r = r * x
    return r


def _fused_window_kernel(x_ref, qkvw_ref, pe_ref, isc_ref, sm_ref, wd_ref,
                         cb_ref, pw_ref, pb_ref, o_ref, *,
                         win, heads, head_dim, focusing_factor, use_kv_branch):
    wd_sz, wh_sz, ww_sz = win
    N = wd_sz * wh_sz * ww_sz
    C = heads * head_dim
    eps = 1e-6

    # ---- gather the strided window rows into one lane-dense (N, C) tile ----
    rows = [x_ref[di, hi] for di in range(wd_sz) for hi in range(wh_sz)]
    xw = jnp.concatenate(rows, axis=0)                          # (N, C) f32

    # ---- fused qkv projection (bf16 MXU operands, f32 accumulation) --------
    # qkv_bias=False in the reference -> no bias add.
    qkv = jnp.dot(xw.astype(jnp.bfloat16), qkvw_ref[...],
                  preferred_element_type=jnp.float32)           # (N, 3C)
    q = qkv[:, :C]
    k = qkv[:, C:2 * C] + pe_ref[...]                           # pos-enc on k only
    v = qkv[:, 2 * C:]

    # ---- focused linear attention, all math on merged-head (N, C) tiles ----
    isc = isc_ref[...]                                          # (1, C) 1/softplus(scale)
    q = (jnp.maximum(q, 0.0) + eps) * isc                       # ReLU kernel fn
    k = (jnp.maximum(k, 0.0) + eps) * isc

    sm = sm_ref[...]                                            # (C, C) per-head 0/1 block-diag
    # per-head squared norms, broadcast back over that head's channels (MXU)
    q_n2 = jnp.dot(q * q, sm, preferred_element_type=jnp.float32)
    k_n2 = jnp.dot(k * k, sm, preferred_element_type=jnp.float32)

    # TODO(synk): focusing_factor > 6 max-normalized branch not implemented.
    qf = _ipow(q, focusing_factor)
    kf = _ipow(k, focusing_factor)
    qf_n2 = jnp.dot(qf * qf, sm, preferred_element_type=jnp.float32)
    kf_n2 = jnp.dot(kf * kf, sm, preferred_element_type=jnp.float32)
    q = qf * (jnp.sqrt(q_n2) * lax.rsqrt(qf_n2))                # renormalize (EUP rsqrt)
    k = kf * (jnp.sqrt(k_n2) * lax.rsqrt(kf_n2))

    # z = 1 / (q . sum_j k_j + eps), per (token, head), broadcast over channels
    ksum = jnp.sum(k, axis=0, keepdims=True)                    # (1, C)
    denom = jnp.dot(q * ksum, sm, preferred_element_type=jnp.float32) + eps
    z = 1.0 / denom                                             # exact divide

    # ---- attention contraction (static branch, as in the reference) --------
    if use_kv_branch:
        # O(N*c^2): (k^T v) restricted to per-head blocks, then q @ (k^T v).
        kv = lax.dot_general(k, v, (((0,), (0,)), ((), ())),
                             preferred_element_type=jnp.float32) * sm    # (C, C)
        attn = jnp.dot(q, kv, preferred_element_type=jnp.float32)        # (N, C)
    else:
        # O(N^2*c): per-head (q k^T) v with plain 2-D dots (tiny tiles).
        parts = []
        for hh in range(heads):
            sl = slice(hh * head_dim, (hh + 1) * head_dim)
            qk = lax.dot_general(q[:, sl], k[:, sl], (((1,), (1,)), ((), ())),
                                 preferred_element_type=jnp.float32)     # (N, N)
            parts.append(jnp.dot(qk, v[:, sl],
                                 preferred_element_type=jnp.float32))    # (N, hd)
        attn = jnp.concatenate(parts, axis=-1)                           # (N, C)
    attn = attn * z

    # ---- in-window depthwise Conv3d (dense, accumulating contraction) ------
    # fm[m, :] = sum_n v[n, :] * wd[n, m, :]    (flat vreg pressure, lane-dense)
    fm = jnp.zeros_like(attn)
    for n in range(N):   # TODO(synk): switch to lax.fori_loop for large windows
        fm = fm + v[n][None, :] * wd_ref[n]
    fm = fm + cb_ref[...]

    # ---- merge + fused output projection ------------------------------------
    y = attn + fm
    out = jnp.dot(y.astype(jnp.bfloat16), pw_ref[...],
                  preferred_element_type=jnp.float32) + pb_ref[...]      # (N, C)

    # ---- scatter rows straight back into (B, D, H, W, C) layout -------------
    for di in range(wd_sz):
        for hi in range(wh_sz):
            r0 = (di * wh_sz + hi) * ww_sz
            o_ref[di, hi] = out[r0:r0 + ww_sz, :]


# ----------------------------------------------------------------------------
# Forward
# ----------------------------------------------------------------------------
def window_attention_3d_forward(x, params, window_size, num_heads,
                                rate=1, focusing_factor=3):
    """Forward of WindowAttention3D (idx=1 / rate=1). `params` from prepare_params()."""
    assert rate == 1, "TODO(synk): ASPA rate>1 (num_heads_rate>0) path not implemented"
    B, D, H, W, C = x.shape
    heads = num_heads // rate
    hd = C // num_heads
    wd_, wh_, ww_ = window_size
    assert D % wd_ == 0 and H % wh_ == 0 and W % ww_ == 0
    nD, nH, nW = D // wd_, H // wh_, W // ww_
    N = wd_ * wh_ * ww_

    # Static branch selection mirroring: i*j*(c+d) > c*d*(i+j), i=j=N, c=d=hd.
    use_kv_branch = (N * N * (hd + hd)) > (hd * hd * (N + N))

    # Metadata-only view; the BlockSpec DMAs the strided window directly.
    xw = x.reshape(B, nD, wd_, nH, wh_, nW, ww_, C)

    win_block = (None, None, wd_, None, wh_, None, ww_, C)
    win_map = lambda b, d, gh, gw: (b, d, 0, gh, 0, gw, 0, 0)

    def const_spec(arr):
        nd = arr.ndim
        return pl.BlockSpec(arr.shape, lambda b, d, gh, gw, _n=nd: (0,) * _n)

    qkv_w = params["qkv_w_bf16"]
    pe = params["pe_full"]
    isc = params["inv_scale_full"]
    sm = params["head_mask"]
    wdm = params["wd_full"]
    cb = params["cb_full"]
    pw = params["proj_w_bf16"]
    pb = params["proj_b_2d"]

    kern = functools.partial(
        _fused_window_kernel, win=(wd_, wh_, ww_), heads=heads, head_dim=hd,
        focusing_factor=focusing_factor, use_kv_branch=use_kv_branch)

    out = pl.pallas_call(
        kern,
        out_shape=jax.ShapeDtypeStruct((B, nD, wd_, nH, wh_, nW, ww_, C),
                                       jnp.float32),
        grid=(B, nD, nH, nW),
        in_specs=[
            pl.BlockSpec(win_block, win_map),   # x window (strided DMA gather)
            const_spec(qkv_w),                  # (C, 3C)   bf16, VMEM-resident
            const_spec(pe),                     # (N, C)    f32
            const_spec(isc),                    # (1, C)    f32
            const_spec(sm),                     # (C, C)    f32 head block-diag
            const_spec(wdm),                    # (N, N, C) f32 dense dwc
            const_spec(cb),                     # (1, C)    f32
            const_spec(pw),                     # (C, C)    bf16
            const_spec(pb),                     # (1, C)    f32
        ],
        out_specs=pl.BlockSpec(win_block, win_map),
        compiler_params=pltpu.CompilerParams(
            dimension_semantics=("parallel", "parallel", "parallel", "parallel"),
            vmem_limit_bytes=32 * 1024 * 1024),
    )(xw, qkv_w, pe, isc, sm, wdm, cb, pw, pb)

    # attn_drop / proj_drop are identity at p = 0.0.
    return out.reshape(B, D, H, W, C)


# ----------------------------------------------------------------------------
# Parameter glue (built once, jit-safe)
# ----------------------------------------------------------------------------
@functools.lru_cache(maxsize=None)
def _dwc_index_map(window_size, kernel_size):
    wd, wh, ww = window_size
    N = wd * wh * ww
    pad = kernel_size // 2
    idx = np.zeros((N, N), np.int32)
    mask = np.zeros((N, N), np.float32)
    for ao in range(wd):
        for bo in range(wh):
            for co in range(ww):
                no = (ao * wh + bo) * ww + co
                for ai in range(wd):
                    for bi in range(wh):
                        for ci in range(ww):
                            ni = (ai * wh + bi) * ww + ci
                            ka, kb, kc = ai - ao + pad, bi - bo + pad, ci - co + pad
                            if (0 <= ka < kernel_size and 0 <= kb < kernel_size
                                    and 0 <= kc < kernel_size):
                                idx[ni, no] = (ka * kernel_size + kb) * kernel_size + kc
                                mask[ni, no] = 1.0
    return idx, mask


def build_dwc_dense(dwc_w, window_size, kernel_size):
    """Depthwise Conv3d (zero-padded, per-window) as a dense (N, N, Ch) matrix."""
    idx, mask = _dwc_index_map(tuple(window_size), kernel_size)
    Ch = dwc_w.shape[0]
    w_flat = dwc_w.reshape(Ch, kernel_size ** 3)            # (Ch, K^3)
    dense = jnp.transpose(w_flat)[idx]                      # (N, N, Ch) gather (jit-safe)
    return dense * mask[:, :, None]


def init_params(key, dim, num_heads, window_size, rate=1, kernel_size=5):
    head_dim = dim // num_heads
    N = window_size[0] * window_size[1] * window_size[2]
    ks = jax.random.split(key, 5)
    return {
        "qkv_w": jax.random.normal(ks[0], (dim, 3 * dim), jnp.float32) * 0.02,
        "proj_w": jax.random.normal(ks[1], (dim, dim), jnp.float32) * 0.02,
        "proj_b": jnp.zeros((dim,), jnp.float32),
        "pos_enc": jax.random.normal(ks[2], (rate, 1, N, head_dim),
                                     jnp.float32) * 0.02,
        "scale": jnp.zeros((rate, 1, 1, head_dim), jnp.float32),
        "dwc_w": jax.random.normal(
            ks[3], (head_dim * rate, 1, kernel_size, kernel_size, kernel_size),
            jnp.float32) * 0.05,
        "dwc_b": jax.random.normal(ks[4], (head_dim * rate,), jnp.float32) * 0.02,
    }


def prepare_params(params, window_size, num_heads, rate=1, kernel_size=5):
    """One-time parameter lowering (hoisted out of the forward, jit-safe).
    Merged-head channel layout: channel = head * head_dim + c."""
    dim = params["qkv_w"].shape[0]
    heads = num_heads // rate
    hd = dim // num_heads
    p = dict(params)
    dense = build_dwc_dense(params["dwc_w"], window_size, kernel_size)   # (N, N, hd)
    p["wd_full"] = jnp.tile(dense, (1, 1, heads)).astype(jnp.float32)    # (N, N, C)
    p["cb_full"] = jnp.tile(params["dwc_b"], heads).reshape(1, -1).astype(jnp.float32)
    p["pe_full"] = jnp.tile(params["pos_enc"][0, 0], (1, heads)).astype(jnp.float32)
    p["inv_scale_full"] = jnp.tile(
        1.0 / jax.nn.softplus(params["scale"][0, 0]), (1, heads)).astype(jnp.float32)
    p["head_mask"] = jnp.asarray(
        np.kron(np.eye(heads, dtype=np.float32),
                np.ones((hd, hd), np.float32)))                          # (C, C)
    p["qkv_w_bf16"] = params["qkv_w"].astype(jnp.bfloat16)
    p["proj_w_bf16"] = params["proj_w"].astype(jnp.bfloat16)
    p["proj_b_2d"] = params["proj_b"].reshape(1, -1).astype(jnp.float32)
    return p


# ----------------------------------------------------------------------------
if __name__ == "__main__":
    key = jax.random.PRNGKey(0)
    k_inp, k_par = jax.random.split(key)

    B, C = 2, 32
    D = H = W = 4
    num_heads = 4
    window_size = (2, 2, 2)          # cubic window (required by the module)

    x = jax.random.normal(k_inp, (B, D, H, W, C), jnp.float32)
    params = prepare_params(init_params(k_par, C, num_heads, window_size),
                            window_size, num_heads)

    fwd = jax.jit(lambda xx, pp: window_attention_3d_forward(
        xx, pp, window_size, num_heads))
    out = jax.block_until_ready(fwd(x, params))

    assert out.shape == (B, D, H, W, C)
    assert bool(jnp.all(jnp.isfinite(out)))
    print("KERNEL_OK")
</pallas_src>

<mosaic_0001>
module attributes {stable_mosaic.version = 11 : i64} {
  func.func @_fused_window_kernel(%arg0: i32, %arg1: i32, %arg2: i32, %arg3: i32, %arg4: memref<1x1x2x1x2x1x2x32xf32, #tpu.memory_space<vmem>>, %arg5: memref<32x96xbf16, #tpu.memory_space<vmem>>, %arg6: memref<8x32xf32, #tpu.memory_space<vmem>>, %arg7: memref<1x32xf32, #tpu.memory_space<vmem>>, %arg8: memref<32x32xf32, #tpu.memory_space<vmem>>, %arg9: memref<8x8x32xf32, #tpu.memory_space<vmem>>, %arg10: memref<1x32xf32, #tpu.memory_space<vmem>>, %arg11: memref<32x32xbf16, #tpu.memory_space<vmem>>, %arg12: memref<1x32xf32, #tpu.memory_space<vmem>>, %arg13: memref<1x1x2x1x2x1x2x32xf32, #tpu.memory_space<vmem>>) attributes {dimension_semantics = [#tpu.dimension_semantics<parallel>, #tpu.dimension_semantics<parallel>, #tpu.dimension_semantics<parallel>, #tpu.dimension_semantics<parallel>], iteration_bounds = array<i64: 2, 2, 2, 2>, scalar_prefetch = 0 : i64, scratch_operands = 0 : i64, tpu.core_type = #tpu.core_type<tc>, window_params = [{transform_indices = @transform_0, window_bounds = array<i64: 1, 1, 2, 1, 2, 1, 2, 32>}, {pipeline_mode = #tpu.pipeline_mode<synchronous>, transform_indices = @transform_1, window_bounds = array<i64: 32, 96>}, {pipeline_mode = #tpu.pipeline_mode<synchronous>, transform_indices = @transform_2, window_bounds = array<i64: 8, 32>}, {pipeline_mode = #tpu.pipeline_mode<synchronous>, transform_indices = @transform_3, window_bounds = array<i64: 1, 32>}, {pipeline_mode = #tpu.pipeline_mode<synchronous>, transform_indices = @transform_4, window_bounds = array<i64: 32, 32>}, {pipeline_mode = #tpu.pipeline_mode<synchronous>, transform_indices = @transform_5, window_bounds = array<i64: 8, 8, 32>}, {pipeline_mode = #tpu.pipeline_mode<synchronous>, transform_indices = @transform_6, window_bounds = array<i64: 1, 32>}, {pipeline_mode = #tpu.pipeline_mode<synchronous>, transform_indices = @transform_7, window_bounds = array<i64: 32, 32>}, {pipeline_mode = #tpu.pipeline_mode<synchronous>, transform_indices = @transform_8, window_bounds = array<i64: 1, 32>}, {transform_indices = @transform_9, window_bounds = array<i64: 1, 1, 2, 1, 2, 1, 2, 32>}]} {
    %c0 = arith.constant 0 : index
    %c0_0 = arith.constant 0 : index
    %c0_1 = arith.constant 0 : index
    %c0_2 = arith.constant 0 : index
    %c0_3 = arith.constant 0 : index
    %c0_4 = arith.constant 0 : index
    %c0_5 = arith.constant 0 : index
    %c0_6 = arith.constant 0 : index
    %0 = vector.load %arg4[%c0, %c0_0, %c0_1, %c0_2, %c0_3, %c0_4, %c0_5, %c0_6] : memref<1x1x2x1x2x1x2x32xf32, #tpu.memory_space<vmem>>, vector<1x1x1x1x1x1x2x32xf32>
    %1 = vector.shape_cast %0 : vector<1x1x1x1x1x1x2x32xf32> to vector<2x32xf32>
    %c0_7 = arith.constant 0 : index
    %c0_8 = arith.constant 0 : index
    %c0_9 = arith.constant 0 : index
    %c0_10 = arith.constant 0 : index
    %c1 = arith.constant 1 : index
    %c0_11 = arith.constant 0 : index
    %c0_12 = arith.constant 0 : index
    %c0_13 = arith.constant 0 : index
    %2 = vector.load %arg4[%c0_7, %c0_8, %c0_9, %c0_10, %c1, %c0_11, %c0_12, %c0_13] : memref<1x1x2x1x2x1x2x32xf32, #tpu.memory_space<vmem>>, vector<1x1x1x1x1x1x2x32xf32>
    %3 = vector.shape_cast %2 : vector<1x1x1x1x1x1x2x32xf32> to vector<2x32xf32>
    %c0_14 = arith.constant 0 : index
    %c0_15 = arith.constant 0 : index
    %c1_16 = arith.constant 1 : index
    %c0_17 = arith.constant 0 : index
    %c0_18 = arith.constant 0 : index
    %c0_19 = arith.constant 0 : index
    %c0_20 = arith.constant 0 : index
    %c0_21 = arith.constant 0 : index
    %4 = vector.load %arg4[%c0_14, %c0_15, %c1_16, %c0_17, %c0_18, %c0_19, %c0_20, %c0_21] : memref<1x1x2x1x2x1x2x32xf32, #tpu.memory_space<vmem>>, vector<1x1x1x1x1x1x2x32xf32>
    %5 = vector.shape_cast %4 : vector<1x1x1x1x1x1x2x32xf32> to vector<2x32xf32>
    %c0_22 = arith.constant 0 : index
    %c0_23 = arith.constant 0 : index
    %c1_24 = arith.constant 1 : index
    %c0_25 = arith.constant 0 : index
    %c1_26 = arith.constant 1 : index
    %c0_27 = arith.constant 0 : index
    %c0_28 = arith.constant 0 : index
    %c0_29 = arith.constant 0 : index
    %6 = vector.load %arg4[%c0_22, %c0_23, %c1_24, %c0_25, %c1_26, %c0_27, %c0_28, %c0_29] : memref<1x1x2x1x2x1x2x32xf32, #tpu.memory_space<vmem>>, vector<1x1x1x1x1x1x2x32xf32>
    %7 = vector.shape_cast %6 : vector<1x1x1x1x1x1x2x32xf32> to vector<2x32xf32>
    %8 = tpu.concatenate %1, %3, %5, %7 in 0 : vector<2x32xf32>, vector<2x32xf32>, vector<2x32xf32>, vector<2x32xf32> -> vector<8x32xf32>
    %9 = arith.truncf %8 : vector<8x32xf32> to vector<8x32xbf16>
    %c0_30 = arith.constant 0 : index
    %c0_31 = arith.constant 0 : index
    %10 = vector.load %arg5[%c0_30, %c0_31] : memref<32x96xbf16, #tpu.memory_space<vmem>>, vector<32x96xbf16>
    %cst = arith.constant dense<0.000000e+00> : vector<8x96xf32>
    %11 = tpu.matmul %9, %10, %cst {dimension_numbers = #tpu.dot_dimension_numbers<[1], [0], [0], [1], [0, 0, 1, 1], [], []>} : vector<8x32xbf16>, vector<32x96xbf16>, vector<8x96xf32> -> vector<8x96xf32>
    %12 = vector.extract_strided_slice %11 {offsets = [0, 0], sizes = [8, 32], strides = [1, 1]} : vector<8x96xf32> to vector<8x32xf32>
    %13 = vector.extract_strided_slice %11 {offsets = [0, 32], sizes = [8, 32], strides = [1, 1]} : vector<8x96xf32> to vector<8x32xf32>
    %c0_32 = arith.constant 0 : index
    %c0_33 = arith.constant 0 : index
    %14 = vector.load %arg6[%c0_32, %c0_33] : memref<8x32xf32, #tpu.memory_space<vmem>>, vector<8x32xf32>
    %15 = arith.addf %13, %14 : vector<8x32xf32>
    %16 = vector.extract_strided_slice %11 {offsets = [0, 64], sizes = [8, 32], strides = [1, 1]} : vector<8x96xf32> to vector<8x32xf32>
    %c0_34 = arith.constant 0 : index
    %c0_35 = arith.constant 0 : index
    %17 = vector.load %arg7[%c0_34, %c0_35] : memref<1x32xf32, #tpu.memory_space<vmem>>, vector<1x32xf32>
    %cst_36 = arith.constant 0.000000e+00 : f32
    %18 = vector.broadcast %cst_36 : f32 to vector<8x32xf32>
    %19 = arith.maximumf %12, %18 : vector<8x32xf32>
    %cst_37 = arith.constant 9.99999997E-7 : f32
    %20 = vector.broadcast %cst_37 : f32 to vector<8x32xf32>
    %21 = arith.addf %19, %20 : vector<8x32xf32>
    %22 = vector.broadcast %17 : vector<1x32xf32> to vector<8x32xf32>
    %23 = arith.mulf %21, %22 : vector<8x32xf32>
    %cst_38 = arith.constant 0.000000e+00 : f32
    %24 = vector.broadcast %cst_38 : f32 to vector<8x32xf32>
    %25 = arith.maximumf %15, %24 : vector<8x32xf32>
    %cst_39 = arith.constant 9.99999997E-7 : f32
    %26 = vector.broadcast %cst_39 : f32 to vector<8x32xf32>
    %27 = arith.addf %25, %26 : vector<8x32xf32>
    %28 = vector.broadcast %17 : vector<1x32xf32> to vector<8x32xf32>
    %29 = arith.mulf %27, %28 : vector<8x32xf32>
    %c0_40 = arith.constant 0 : index
    %c0_41 = arith.constant 0 : index
    %30 = vector.load %arg8[%c0_40, %c0_41] : memref<32x32xf32, #tpu.memory_space<vmem>>, vector<32x32xf32>
    %31 = arith.mulf %23, %23 : vector<8x32xf32>
    %cst_42 = arith.constant dense<0.000000e+00> : vector<8x32xf32>
    %32 = tpu.matmul %31, %30, %cst_42 {dimension_numbers = #tpu.dot_dimension_numbers<[1], [0], [0], [1], [0, 0, 1, 1], [], []>} : vector<8x32xf32>, vector<32x32xf32>, vector<8x32xf32> -> vector<8x32xf32>
    %33 = arith.mulf %29, %29 : vector<8x32xf32>
    %cst_43 = arith.constant dense<0.000000e+00> : vector<8x32xf32>
    %34 = tpu.matmul %33, %30, %cst_43 {dimension_numbers = #tpu.dot_dimension_numbers<[1], [0], [0], [1], [0, 0, 1, 1], [], []>} : vector<8x32xf32>, vector<32x32xf32>, vector<8x32xf32> -> vector<8x32xf32>
    %35 = arith.mulf %23, %23 : vector<8x32xf32>
    %36 = arith.mulf %35, %23 : vector<8x32xf32>
    %37 = arith.mulf %29, %29 : vector<8x32xf32>
    %38 = arith.mulf %37, %29 : vector<8x32xf32>
    %39 = arith.mulf %36, %36 : vector<8x32xf32>
    %cst_44 = arith.constant dense<0.000000e+00> : vector<8x32xf32>
    %40 = tpu.matmul %39, %30, %cst_44 {dimension_numbers = #tpu.dot_dimension_numbers<[1], [0], [0], [1], [0, 0, 1, 1], [], []>} : vector<8x32xf32>, vector<32x32xf32>, vector<8x32xf32> -> vector<8x32xf32>
    %41 = arith.mulf %38, %38 : vector<8x32xf32>
    %cst_45 = arith.constant dense<0.000000e+00> : vector<8x32xf32>
    %42 = tpu.matmul %41, %30, %cst_45 {dimension_numbers = #tpu.dot_dimension_numbers<[1], [0], [0], [1], [0, 0, 1, 1], [], []>} : vector<8x32xf32>, vector<32x32xf32>, vector<8x32xf32> -> vector<8x32xf32>
    %43 = math.sqrt %32 : vector<8x32xf32>
    %44 = math.rsqrt %40 : vector<8x32xf32>
    %45 = arith.mulf %43, %44 : vector<8x32xf32>
    %46 = arith.mulf %36, %45 : vector<8x32xf32>
    %47 = math.sqrt %34 : vector<8x32xf32>
    %48 = math.rsqrt %42 : vector<8x32xf32>
    %49 = arith.mulf %47, %48 : vector<8x32xf32>
    %50 = arith.mulf %38, %49 : vector<8x32xf32>
    %cst_46 = arith.constant dense<0.000000e+00> : vector<32xf32>
    %51 = vector.multi_reduction <add>, %50, %cst_46 [0] : vector<8x32xf32> to vector<32xf32>
    %52 = vector.shape_cast %51 : vector<32xf32> to vector<1x32xf32>
    %53 = vector.broadcast %52 : vector<1x32xf32> to vector<8x32xf32>
    %54 = arith.mulf %46, %53 : vector<8x32xf32>
    %cst_47 = arith.constant dense<0.000000e+00> : vector<8x32xf32>
    %55 = tpu.matmul %54, %30, %cst_47 {dimension_numbers = #tpu.dot_dimension_numbers<[1], [0], [0], [1], [0, 0, 1, 1], [], []>} : vector<8x32xf32>, vector<32x32xf32>, vector<8x32xf32> -> vector<8x32xf32>
    %cst_48 = arith.constant 9.99999997E-7 : f32
    %56 = vector.broadcast %cst_48 : f32 to vector<8x32xf32>
    %57 = arith.addf %55, %56 : vector<8x32xf32>
    %cst_49 = arith.constant 1.000000e+00 : f32
    %58 = vector.broadcast %cst_49 : f32 to vector<8x32xf32>
    %59 = arith.divf %58, %57 : vector<8x32xf32>
    %60 = vector.extract_strided_slice %46 {offsets = [0, 0], sizes = [8, 8], strides = [1, 1]} : vector<8x32xf32> to vector<8x8xf32>
    %61 = vector.extract_strided_slice %50 {offsets = [0, 0], sizes = [8, 8], strides = [1, 1]} : vector<8x32xf32> to vector<8x8xf32>
    %cst_50 = arith.constant dense<0.000000e+00> : vector<8x8xf32>
    %62 = tpu.matmul %60, %61, %cst_50 {dimension_numbers = #tpu.dot_dimension_numbers<[1], [1], [0], [0], [0, 0, 1, 0], [], []>} : vector<8x8xf32>, vector<8x8xf32>, vector<8x8xf32> -> vector<8x8xf32>
    %63 = vector.extract_strided_slice %16 {offsets = [0, 0], sizes = [8, 8], strides = [1, 1]} : vector<8x32xf32> to vector<8x8xf32>
    %cst_51 = arith.constant dense<0.000000e+00> : vector<8x8xf32>
    %64 = tpu.matmul %62, %63, %cst_51 {dimension_numbers = #tpu.dot_dimension_numbers<[1], [0], [0], [1], [0, 0, 1, 1], [], []>} : vector<8x8xf32>, vector<8x8xf32>, vector<8x8xf32> -> vector<8x8xf32>
    %65 = vector.extract_strided_slice %46 {offsets = [0, 8], sizes = [8, 8], strides = [1, 1]} : vector<8x32xf32> to vector<8x8xf32>
    %66 = vector.extract_strided_slice %50 {offsets = [0, 8], sizes = [8, 8], strides = [1, 1]} : vector<8x32xf32> to vector<8x8xf32>
    %cst_52 = arith.constant dense<0.000000e+00> : vector<8x8xf32>
    %67 = tpu.matmul %65, %66, %cst_52 {dimension_numbers = #tpu.dot_dimension_numbers<[1], [1], [0], [0], [0, 0, 1, 0], [], []>} : vector<8x8xf32>, vector<8x8xf32>, vector<8x8xf32> -> vector<8x8xf32>
    %68 = vector.extract_strided_slice %16 {offsets = [0, 8], sizes = [8, 8], strides = [1, 1]} : vector<8x32xf32> to vector<8x8xf32>
    %cst_53 = arith.constant dense<0.000000e+00> : vector<8x8xf32>
    %69 = tpu.matmul %67, %68, %cst_53 {dimension_numbers = #tpu.dot_dimension_numbers<[1], [0], [0], [1], [0, 0, 1, 1], [], []>} : vector<8x8xf32>, vector<8x8xf32>, vector<8x8xf32> -> vector<8x8xf32>
    %70 = vector.extract_strided_slice %46 {offsets = [0, 16], sizes = [8, 8], strides = [1, 1]} : vector<8x32xf32> to vector<8x8xf32>
    %71 = vector.extract_strided_slice %50 {offsets = [0, 16], sizes = [8, 8], strides = [1, 1]} : vector<8x32xf32> to vector<8x8xf32>
    %cst_54 = arith.constant dense<0.000000e+00> : vector<8x8xf32>
    %72 = tpu.matmul %70, %71, %cst_54 {dimension_numbers = #tpu.dot_dimension_numbers<[1], [1], [0], [0], [0, 0, 1, 0], [], []>} : vector<8x8xf32>, vector<8x8xf32>, vector<8x8xf32> -> vector<8x8xf32>
    %73 = vector.extract_strided_slice %16 {offsets = [0, 16], sizes = [8, 8], strides = [1, 1]} : vector<8x32xf32> to vector<8x8xf32>
    %cst_55 = arith.constant dense<0.000000e+00> : vector<8x8xf32>
    %74 = tpu.matmul %72, %73, %cst_55 {dimension_numbers = #tpu.dot_dimension_numbers<[1], [0], [0], [1], [0, 0, 1, 1], [], []>} : vector<8x8xf32>, vector<8x8xf32>, vector<8x8xf32> -> vector<8x8xf32>
    %75 = vector.extract_strided_slice %46 {offsets = [0, 24], sizes = [8, 8], strides = [1, 1]} : vector<8x32xf32> to vector<8x8xf32>
    %76 = vector.extract_strided_slice %50 {offsets = [0, 24], sizes = [8, 8], strides = [1, 1]} : vector<8x32xf32> to vector<8x8xf32>
    %cst_56 = arith.constant dense<0.000000e+00> : vector<8x8xf32>
    %77 = tpu.matmul %75, %76, %cst_56 {dimension_numbers = #tpu.dot_dimension_numbers<[1], [1], [0], [0], [0, 0, 1, 0], [], []>} : vector<8x8xf32>, vector<8x8xf32>, vector<8x8xf32> -> vector<8x8xf32>
    %78 = vector.extract_strided_slice %16 {offsets = [0, 24], sizes = [8, 8], strides = [1, 1]} : vector<8x32xf32> to vector<8x8xf32>
    %cst_57 = arith.constant dense<0.000000e+00> : vector<8x8xf32>
    %79 = tpu.matmul %77, %78, %cst_57 {dimension_numbers = #tpu.dot_dimension_numbers<[1], [0], [0], [1], [0, 0, 1, 1], [], []>} : vector<8x8xf32>, vector<8x8xf32>, vector<8x8xf32> -> vector<8x8xf32>
    %80 = tpu.concatenate %64, %69, %74, %79 in 1 : vector<8x8xf32>, vector<8x8xf32>, vector<8x8xf32>, vector<8x8xf32> -> vector<8x32xf32>
    %81 = arith.mulf %80, %59 : vector<8x32xf32>
    %cst_58 = arith.constant 0.000000e+00 : f32
    %82 = vector.broadcast %cst_58 : f32 to vector<8x32xf32>
    %83 = vector.extract_strided_slice %16 {offsets = [0, 0], sizes = [1, 32], strides = [1, 1]} : vector<8x32xf32> to vector<1x32xf32>
    %84 = vector.shape_cast %83 : vector<1x32xf32> to vector<32xf32>
    %85 = vector.shape_cast %84 : vector<32xf32> to vector<1x32xf32>
    %c0_59 = arith.constant 0 : index
    %c0_60 = arith.constant 0 : index
    %c0_61 = arith.constant 0 : index
    %86 = vector.load %arg9[%c0_59, %c0_60, %c0_61] : memref<8x8x32xf32, #tpu.memory_space<vmem>>, vector<1x8x32xf32>
    %87 = vector.shape_cast %86 : vector<1x8x32xf32> to vector<8x32xf32>
    %88 = vector.broadcast %85 : vector<1x32xf32> to vector<8x32xf32>
    %89 = arith.mulf %88, %87 : vector<8x32xf32>
    %90 = arith.addf %82, %89 : vector<8x32xf32>
    %91 = vector.extract_strided_slice %16 {offsets = [1, 0], sizes = [1, 32], strides = [1, 1]} : vector<8x32xf32> to vector<1x32xf32>
    %92 = vector.shape_cast %91 : vector<1x32xf32> to vector<32xf32>
    %93 = vector.shape_cast %92 : vector<32xf32> to vector<1x32xf32>
    %c1_62 = arith.constant 1 : index
    %c0_63 = arith.constant 0 : index
    %c0_64 = arith.constant 0 : index
    %94 = vector.load %arg9[%c1_62, %c0_63, %c0_64] : memref<8x8x32xf32, #tpu.memory_space<vmem>>, vector<1x8x32xf32>
    %95 = vector.shape_cast %94 : vector<1x8x32xf32> to vector<8x32xf32>
    %96 = vector.broadcast %93 : vector<1x32xf32> to vector<8x32xf32>
    %97 = arith.mulf %96, %95 : vector<8x32xf32>
    %98 = arith.addf %90, %97 : vector<8x32xf32>
    %99 = vector.extract_strided_slice %16 {offsets = [2, 0], sizes = [1, 32], strides = [1, 1]} : vector<8x32xf32> to vector<1x32xf32>
    %100 = vector.shape_cast %99 : vector<1x32xf32> to vector<32xf32>
    %101 = vector.shape_cast %100 : vector<32xf32> to vector<1x32xf32>
    %c2 = arith.constant 2 : index
    %c0_65 = arith.constant 0 : index
    %c0_66 = arith.constant 0 : index
    %102 = vector.load %arg9[%c2, %c0_65, %c0_66] : memref<8x8x32xf32, #tpu.memory_space<vmem>>, vector<1x8x32xf32>
    %103 = vector.shape_cast %102 : vector<1x8x32xf32> to vector<8x32xf32>
    %104 = vector.broadcast %101 : vector<1x32xf32> to vector<8x32xf32>
    %105 = arith.mulf %104, %103 : vector<8x32xf32>
    %106 = arith.addf %98, %105 : vector<8x32xf32>
    %107 = vector.extract_strided_slice %16 {offsets = [3, 0], sizes = [1, 32], strides = [1, 1]} : vector<8x32xf32> to vector<1x32xf32>
    %108 = vector.shape_cast %107 : vector<1x32xf32> to vector<32xf32>
    %109 = vector.shape_cast %108 : vector<32xf32> to vector<1x32xf32>
    %c3 = arith.constant 3 : index
    %c0_67 = arith.constant 0 : index
    %c0_68 = arith.constant 0 : index
    %110 = vector.load %arg9[%c3, %c0_67, %c0_68] : memref<8x8x32xf32, #tpu.memory_space<vmem>>, vector<1x8x32xf32>
    %111 = vector.shape_cast %110 : vector<1x8x32xf32> to vector<8x32xf32>
    %112 = vector.broadcast %109 : vector<1x32xf32> to vector<8x32xf32>
    %113 = arith.mulf %112, %111 : vector<8x32xf32>
    %114 = arith.addf %106, %113 : vector<8x32xf32>
    %115 = vector.extract_strided_slice %16 {offsets = [4, 0], sizes = [1, 32], strides = [1, 1]} : vector<8x32xf32> to vector<1x32xf32>
    %116 = vector.shape_cast %115 : vector<1x32xf32> to vector<32xf32>
    %117 = vector.shape_cast %116 : vector<32xf32> to vector<1x32xf32>
    %c4 = arith.constant 4 : index
    %c0_69 = arith.constant 0 : index
    %c0_70 = arith.constant 0 : index
    %118 = vector.load %arg9[%c4, %c0_69, %c0_70] : memref<8x8x32xf32, #tpu.memory_space<vmem>>, vector<1x8x32xf32>
    %119 = vector.shape_cast %118 : vector<1x8x32xf32> to vector<8x32xf32>
    %120 = vector.broadcast %117 : vector<1x32xf32> to vector<8x32xf32>
    %121 = arith.mulf %120, %119 : vector<8x32xf32>
    %122 = arith.addf %114, %121 : vector<8x32xf32>
    %123 = vector.extract_strided_slice %16 {offsets = [5, 0], sizes = [1, 32], strides = [1, 1]} : vector<8x32xf32> to vector<1x32xf32>
    %124 = vector.shape_cast %123 : vector<1x32xf32> to vector<32xf32>
    %125 = vector.shape_cast %124 : vector<32xf32> to vector<1x32xf32>
    %c5 = arith.constant 5 : index
    %c0_71 = arith.constant 0 : index
    %c0_72 = arith.constant 0 : index
    %126 = vector.load %arg9[%c5, %c0_71, %c0_72] : memref<8x8x32xf32, #tpu.memory_space<vmem>>, vector<1x8x32xf32>
    %127 = vector.shape_cast %126 : vector<1x8x32xf32> to vector<8x32xf32>
    %128 = vector.broadcast %125 : vector<1x32xf32> to vector<8x32xf32>
    %129 = arith.mulf %128, %127 : vector<8x32xf32>
    %130 = arith.addf %122, %129 : vector<8x32xf32>
    %131 = vector.extract_strided_slice %16 {offsets = [6, 0], sizes = [1, 32], strides = [1, 1]} : vector<8x32xf32> to vector<1x32xf32>
    %132 = vector.shape_cast %131 : vector<1x32xf32> to vector<32xf32>
    %133 = vector.shape_cast %132 : vector<32xf32> to vector<1x32xf32>
    %c6 = arith.constant 6 : index
    %c0_73 = arith.constant 0 : index
    %c0_74 = arith.constant 0 : index
    %134 = vector.load %arg9[%c6, %c0_73, %c0_74] : memref<8x8x32xf32, #tpu.memory_space<vmem>>, vector<1x8x32xf32>
    %135 = vector.shape_cast %134 : vector<1x8x32xf32> to vector<8x32xf32>
    %136 = vector.broadcast %133 : vector<1x32xf32> to vector<8x32xf32>
    %137 = arith.mulf %136, %135 : vector<8x32xf32>
    %138 = arith.addf %130, %137 : vector<8x32xf32>
    %139 = vector.extract_strided_slice %16 {offsets = [7, 0], sizes = [1, 32], strides = [1, 1]} : vector<8x32xf32> to vector<1x32xf32>
    %140 = vector.shape_cast %139 : vector<1x32xf32> to vector<32xf32>
    %141 = vector.shape_cast %140 : vector<32xf32> to vector<1x32xf32>
    %c7 = arith.constant 7 : index
    %c0_75 = arith.constant 0 : index
    %c0_76 = arith.constant 0 : index
    %142 = vector.load %arg9[%c7, %c0_75, %c0_76] : memref<8x8x32xf32, #tpu.memory_space<vmem>>, vector<1x8x32xf32>
    %143 = vector.shape_cast %142 : vector<1x8x32xf32> to vector<8x32xf32>
    %144 = vector.broadcast %141 : vector<1x32xf32> to vector<8x32xf32>
    %145 = arith.mulf %144, %143 : vector<8x32xf32>
    %146 = arith.addf %138, %145 : vector<8x32xf32>
    %c0_77 = arith.constant 0 : index
    %c0_78 = arith.constant 0 : index
    %147 = vector.load %arg10[%c0_77, %c0_78] : memref<1x32xf32, #tpu.memory_space<vmem>>, vector<1x32xf32>
    %148 = vector.broadcast %147 : vector<1x32xf32> to vector<8x32xf32>
    %149 = arith.addf %146, %148 : vector<8x32xf32>
    %150 = arith.addf %81, %149 : vector<8x32xf32>
    %151 = arith.truncf %150 : vector<8x32xf32> to vector<8x32xbf16>
    %c0_79 = arith.constant 0 : index
    %c0_80 = arith.constant 0 : index
    %152 = vector.load %arg11[%c0_79, %c0_80] : memref<32x32xbf16, #tpu.memory_space<vmem>>, vector<32x32xbf16>
    %cst_81 = arith.constant dense<0.000000e+00> : vector<8x32xf32>
    %153 = tpu.matmul %151, %152, %cst_81 {dimension_numbers = #tpu.dot_dimension_numbers<[1], [0], [0], [1], [0, 0, 1, 1], [], []>} : vector<8x32xbf16>, vector<32x32xbf16>, vector<8x32xf32> -> vector<8x32xf32>
    %c0_82 = arith.constant 0 : index
    %c0_83 = arith.constant 0 : index
    %154 = vector.load %arg12[%c0_82, %c0_83] : memref<1x32xf32, #tpu.memory_space<vmem>>, vector<1x32xf32>
    %155 = vector.broadcast %154 : vector<1x32xf32> to vector<8x32xf32>
    %156 = arith.addf %153, %155 : vector<8x32xf32>
    %157 = vector.extract_strided_slice %156 {offsets = [0, 0], sizes = [2, 32], strides = [1, 1]} : vector<8x32xf32> to vector<2x32xf32>
    %c0_84 = arith.constant 0 : index
    %c0_85 = arith.constant 0 : index
    %c0_86 = arith.constant 0 : index
    %c0_87 = arith.constant 0 : index
    %c0_88 = arith.constant 0 : index
    %c0_89 = arith.constant 0 : index
    %c0_90 = arith.constant 0 : index
    %c0_91 = arith.constant 0 : index
    %158 = vector.load %arg13[%c0_84, %c0_85, %c0_86, %c0_87, %c0_88, %c0_89, %c0_90, %c0_91] : memref<1x1x2x1x2x1x2x32xf32, #tpu.memory_space<vmem>>, vector<1x1x1x1x1x1x2x32xf32>
    %159 = vector.shape_cast %158 : vector<1x1x1x1x1x1x2x32xf32> to vector<2x32xf32>
    %160 = vector.shape_cast %157 : vector<2x32xf32> to vector<1x1x1x1x1x1x2x32xf32>
    tpu.vector_store %arg13[%c0_84, %c0_85, %c0_86, %c0_87, %c0_88, %c0_89, %c0_90, %c0_91], %160 {strides = array<i32>} : memref<1x1x2x1x2x1x2x32xf32, #tpu.memory_space<vmem>>, vector<1x1x1x1x1x1x2x32xf32>,
    %161 = vector.extract_strided_slice %156 {offsets = [2, 0], sizes = [2, 32], strides = [1, 1]} : vector<8x32xf32> to vector<2x32xf32>
    %c0_92 = arith.constant 0 : index
    %c0_93 = arith.constant 0 : index
    %c0_94 = arith.constant 0 : index
    %c0_95 = arith.constant 0 : index
    %c1_96 = arith.constant 1 : index
    %c0_97 = arith.constant 0 : index
    %c0_98 = arith.constant 0 : index
    %c0_99 = arith.constant 0 : index
    %162 = vector.load %arg13[%c0_92, %c0_93, %c0_94, %c0_95, %c1_96, %c0_97, %c0_98, %c0_99] : memref<1x1x2x1x2x1x2x32xf32, #tpu.memory_space<vmem>>, vector<1x1x1x1x1x1x2x32xf32>
    %163 = vector.shape_cast %162 : vector<1x1x1x1x1x1x2x32xf32> to vector<2x32xf32>
    %164 = vector.shape_cast %161 : vector<2x32xf32> to vector<1x1x1x1x1x1x2x32xf32>
    tpu.vector_store %arg13[%c0_92, %c0_93, %c0_94, %c0_95, %c1_96, %c0_97, %c0_98, %c0_99], %164 {strides = array<i32>} : memref<1x1x2x1x2x1x2x32xf32, #tpu.memory_space<vmem>>, vector<1x1x1x1x1x1x2x32xf32>,
    %165 = vector.extract_strided_slice %156 {offsets = [4, 0], sizes = [2, 32], strides = [1, 1]} : vector<8x32xf32> to vector<2x32xf32>
    %c0_100 = arith.constant 0 : index
    %c0_101 = arith.constant 0 : index
    %c1_102 = arith.constant 1 : index
    %c0_103 = arith.constant 0 : index
    %c0_104 = arith.constant 0 : index
    %c0_105 = arith.constant 0 : index
    %c0_106 = arith.constant 0 : index
    %c0_107 = arith.constant 0 : index
    %166 = vector.load %arg13[%c0_100, %c0_101, %c1_102, %c0_103, %c0_104, %c0_105, %c0_106, %c0_107] : memref<1x1x2x1x2x1x2x32xf32, #tpu.memory_space<vmem>>, vector<1x1x1x1x1x1x2x32xf32>
    %167 = vector.shape_cast %166 : vector<1x1x1x1x1x1x2x32xf32> to vector<2x32xf32>
    %168 = vector.shape_cast %165 : vector<2x32xf32> to vector<1x1x1x1x1x1x2x32xf32>
    tpu.vector_store %arg13[%c0_100, %c0_101, %c1_102, %c0_103, %c0_104, %c0_105, %c0_106, %c0_107], %168 {strides = array<i32>} : memref<1x1x2x1x2x1x2x32xf32, #tpu.memory_space<vmem>>, vector<1x1x1x1x1x1x2x32xf32>,
    %169 = vector.extract_strided_slice %156 {offsets = [6, 0], sizes = [2, 32], strides = [1, 1]} : vector<8x32xf32> to vector<2x32xf32>
    %c0_108 = arith.constant 0 : index
    %c0_109 = arith.constant 0 : index
    %c1_110 = arith.constant 1 : index
    %c0_111 = arith.constant 0 : index
    %c1_112 = arith.constant 1 : index
    %c0_113 = arith.constant 0 : index
    %c0_114 = arith.constant 0 : index
    %c0_115 = arith.constant 0 : index
    %170 = vector.load %arg13[%c0_108, %c0_109, %c1_110, %c0_111, %c1_112, %c0_113, %c0_114, %c0_115] : memref<1x1x2x1x2x1x2x32xf32, #tpu.memory_space<vmem>>, vector<1x1x1x1x1x1x2x32xf32>
    %171 = vector.shape_cast %170 : vector<1x1x1x1x1x1x2x32xf32> to vector<2x32xf32>
    %172 = vector.shape_cast %169 : vector<2x32xf32> to vector<1x1x1x1x1x1x2x32xf32>
    tpu.vector_store %arg13[%c0_108, %c0_109, %c1_110, %c0_111, %c1_112, %c0_113, %c0_114, %c0_115], %172 {strides = array<i32>} : memref<1x1x2x1x2x1x2x32xf32, #tpu.memory_space<vmem>>, vector<1x1x1x1x1x1x2x32xf32>,
    return
  }
  func.func @transform_0(%arg0: i32, %arg1: i32, %arg2: i32, %arg3: i32) -> (i32, i32, i32, i32, i32, i32, i32, i32) {
    %c0_i32 = arith.constant 0 : i32
    %c0_i32_0 = arith.constant 0 : i32
    %c0_i32_1 = arith.constant 0 : i32
    %c0_i32_2 = arith.constant 0 : i32
    %c0_i32_3 = arith.constant 0 : i32
    return %arg0, %arg1, %c0_i32, %arg2, %c0_i32_0, %arg3, %c0_i32_1, %c0_i32_2 : i32, i32, i32, i32, i32, i32, i32, i32
  }
  func.func @transform_1(%arg0: i32, %arg1: i32, %arg2: i32, %arg3: i32) -> (i32, i32) {
    %c0_i32 = arith.constant 0 : i32
    %c0_i32_0 = arith.constant 0 : i32
    %c0_i32_1 = arith.constant 0 : i32
    return %c0_i32, %c0_i32_0 : i32, i32
  }
  func.func @transform_2(%arg0: i32, %arg1: i32, %arg2: i32, %arg3: i32) -> (i32, i32) {
    %c0_i32 = arith.constant 0 : i32
    %c0_i32_0 = arith.constant 0 : i32
    %c0_i32_1 = arith.constant 0 : i32
    return %c0_i32, %c0_i32_0 : i32, i32
  }
  func.func @transform_3(%arg0: i32, %arg1: i32, %arg2: i32, %arg3: i32) -> (i32, i32) {
    %c0_i32 = arith.constant 0 : i32
    %c0_i32_0 = arith.constant 0 : i32
    %c0_i32_1 = arith.constant 0 : i32
    return %c0_i32, %c0_i32_0 : i32, i32
  }
  func.func @transform_4(%arg0: i32, %arg1: i32, %arg2: i32, %arg3: i32) -> (i32, i32) {
    %c0_i32 = arith.constant 0 : i32
    %c0_i32_0 = arith.constant 0 : i32
    %c0_i32_1 = arith.constant 0 : i32
    return %c0_i32, %c0_i32_0 : i32, i32
  }
  func.func @transform_5(%arg0: i32, %arg1: i32, %arg2: i32, %arg3: i32) -> (i32, i32, i32) {
    %c0_i32 = arith.constant 0 : i32
    %c0_i32_0 = arith.constant 0 : i32
    %c0_i32_1 = arith.constant 0 : i32
    %c0_i32_2 = arith.constant 0 : i32
    return %c0_i32, %c0_i32_0, %c0_i32_1 : i32, i32, i32
  }
  func.func @transform_6(%arg0: i32, %arg1: i32, %arg2: i32, %arg3: i32) -> (i32, i32) {
    %c0_i32 = arith.constant 0 : i32
    %c0_i32_0 = arith.constant 0 : i32
    %c0_i32_1 = arith.constant 0 : i32
    return %c0_i32, %c0_i32_0 : i32, i32
  }
  func.func @transform_7(%arg0: i32, %arg1: i32, %arg2: i32, %arg3: i32) -> (i32, i32) {
    %c0_i32 = arith.constant 0 : i32
    %c0_i32_0 = arith.constant 0 : i32
    %c0_i32_1 = arith.constant 0 : i32
    return %c0_i32, %c0_i32_0 : i32, i32
  }
  func.func @transform_8(%arg0: i32, %arg1: i32, %arg2: i32, %arg3: i32) -> (i32, i32) {
    %c0_i32 = arith.constant 0 : i32
    %c0_i32_0 = arith.constant 0 : i32
    %c0_i32_1 = arith.constant 0 : i32
    return %c0_i32, %c0_i32_0 : i32, i32
  }
  func.func @transform_9(%arg0: i32, %arg1: i32, %arg2: i32, %arg3: i32) -> (i32, i32, i32, i32, i32, i32, i32, i32) {
    %c0_i32 = arith.constant 0 : i32
    %c0_i32_0 = arith.constant 0 : i32
    %c0_i32_1 = arith.constant 0 : i32
    %c0_i32_2 = arith.constant 0 : i32
    %c0_i32_3 = arith.constant 0 : i32
    return %arg0, %arg1, %c0_i32, %arg2, %c0_i32_0, %arg3, %c0_i32_1, %c0_i32_2 : i32, i32, i32, i32, i32, i32, i32, i32
  }
}

</mosaic_0001>

<llo_original>
// kernel: _lambda_.1
$region0: #{_lambda_.1}
  #allocation0 [shape = 'u32[]', space=smem, size = 0x4, offset = 0x4, fixed_abs, tag = 'smem constant byte address 0x4 - core index']
  #allocation1 [shape = 'u32[144,128]{1,0:T(1,128)}', space=vmem, size = 0x12000, scoped, tag = 'internal scratch']
  #allocation11 [shape = 's32[]', space=sflag, size = 0x4, offset = 0, fixed_abs, tag = 'sflag constant byte address 0x0 - dummy sync flag']
  #allocation13 [shape = 's32[]', space=sflag, size = 0x4, offset = 0, fixed_abs, tag = 'sflag constant byte address 0x0 - dummy sync flag']
  %s0 = inlined_call_operand.hbm [shape: f32[2,2,2,2,2,2,2,32], index: 0, kind: input, shape index: {}]
  %s1 = inlined_call_operand.vmem [shape: bf16[32,96], index: 1, kind: input, shape index: {}]
  %s2 = inlined_call_operand.vmem [shape: f32[8,32], index: 2, kind: input, shape index: {}]
  %s3 = inlined_call_operand.vmem [shape: f32[1,32], index: 3, kind: input, shape index: {}]
  %s4 = inlined_call_operand.hbm [shape: f32[32,32], index: 4, kind: input, shape index: {}]
  %s5 = inlined_call_operand.hbm [shape: f32[8,8,32], index: 5, kind: input, shape index: {}]
  %s6 = inlined_call_operand.vmem [shape: f32[1,32], index: 6, kind: input, shape index: {}]
  %s7 = inlined_call_operand.hbm [shape: bf16[32,32], index: 7, kind: input, shape index: {}]
  %s8 = inlined_call_operand.vmem [shape: f32[1,32], index: 8, kind: input, shape index: {}]
  %s9 = inlined_call_operand.hbm [shape: f32[2,2,2,2,2,2,2,32], index: 9, kind: output, shape index: {}]
  %s10 = sld [smem:[#allocation0]]
  $region85: #{_lambda_.1} parent=0
    _
  %s12 = ssub.s32 1, %s10
  %s13 = scalar_select 0, %s12, %s10
  $region1: #{_lambda_.1} parent=0
    #allocation2 [shape = 'u8[8192]{0}', space=vmem, size = 0x2000, scoped, tag = 'input window, operand 0']
    #allocation3 [shape = 's32[2]{0}', space=sflag, size = 0x8, scoped, tag = 'scoped memory for _lambda_.1']
    #allocation4 [shape = 's32[2]{0}', space=sflag, size = 0x8, scoped, tag = 'scoped memory for _lambda_.1']
    #allocation5 [shape = 'u8[16384]{0}', space=vmem, size = 0x4000, scoped, tag = 'input window, operand 4, single buffered']
    #allocation6 [shape = 's32[1]{0}', space=sflag, size = 0x4, scoped, tag = 'scoped memory for _lambda_.1']
    #allocation7 [shape = 'u8[32768]{0}', space=vmem, size = 0x8000, scoped, tag = 'input window, operand 5, single buffered']
    #allocation8 [shape = 'u8[8192]{0}', space=vmem, size = 0x2000, scoped, tag = 'input window, operand 7, single buffered']
    #allocation9 [shape = 's32[1]{0}', space=sflag, size = 0x4, scoped, tag = 'scoped memory for _lambda_.1']
    #allocation10 [shape = 'u8[8192]{0}', space=vmem, size = 0x2000, scoped, tag = 'output window, operand 0']
    %14 = vsyncpa [#allocation3], 0
    %s15 = scalar_lea.sflag [#allocation3], 1
    %16 = vsyncpa %s15, 0
    %17 = vsyncpa [#allocation6], 0
    %18 = vsyncpa [#allocation9], 0
    %19 = vsyncpa [#allocation4], 0
    %s20 = scalar_lea.sflag [#allocation4], 1
    %21 = vsyncpa %s20, 0
    loop: start=0, step=1, limit=18
    $region2: #{_lambda_.1} parent=1 // loop_pre_header
      _
    $region3: #{_lambda_.1} parent=1 // loop_header
      %s23 = sphi 0, %s27
      %p24 = scmp.ge.s32.totalorder %s23, 18
      %s30 = sphi 0, %s56
      %s31 = sphi 0, %s52
      %s32 = sphi 0, %s48
      %s33 = sphi 0, %s44
      %s34 = sphi 0, %s30
      %s35 = sphi 0, %s31
      %s36 = sphi 0, %s32
      %s37 = sphi 0, %s33
      %s38 = sphi 0, %s34
      %s39 = sphi 0, %s35
      %s40 = sphi 0, %s36
      %s41 = sphi 0, %s37
      %s65 = sphi 0, %s67
      %s68 = sphi 0, %s65
      %s69 = sphi 0, %s68
      %s85 = sphi 0, %s69
      %s89 = sphi 0, %s89
      %s91 = sphi 0, %s89
      %s92 = sphi 0, %s91
      %s106 = sphi 0, %s92
      %s110 = sphi 0, %s110
      %s112 = sphi 0, %s110
      %s113 = sphi 0, %s112
      %s127 = sphi 0, %s113
      %s131 = sphi 0, %s131
      %s133 = sphi 0, %s131
      %s134 = sphi 0, %s133
      %s148 = sphi 0, %s134
      %s152 = sphi 0, %s152
      %s154 = sphi 0, %s152
      %s155 = sphi 0, %s154
      %s169 = sphi 0, %s155
      %s173 = sphi 0, %s173
      %s175 = sphi 0, %s173
      %s176 = sphi 0, %s175
      %s190 = sphi 0, %s176
      %s194 = sphi 0, %s194
      %s196 = sphi 0, %s194
      %s197 = sphi 0, %s196
      %s211 = sphi 0, %s197
      %s215 = sphi 0, %s215
      %s217 = sphi 0, %s215
      %s218 = sphi 0, %s217
      %s232 = sphi 0, %s218
      %s236 = sphi 0, %s236
      %s238 = sphi 0, %s236
      %s239 = sphi 0, %s238
      %s253 = sphi 0, %s239
      %s265 = sphi 0, %s267
      %s268 = sphi 0, %s265
      %s269 = sphi 0, %s268
      %s285 = sphi 0, %s269
    $region4: #{_lambda_.1} parent=1 // loop_header_branch
      %26 = sbr.rel (%p24) target = $region8
    $region5: #{_lambda_.1} parent=1 // loop_body
      %s28 = ssub.s32 %s23, 1
      %s29 = ssub.s32 %s23, 2
      %s42 = sadd.s32 1, %s33
      %p43 = scmp.ge.s32.totalorder %s42, 2
      %s44 = scalar_select %p43, 0, %s42
      %s45 = sadd.s32 1, %s32
      %s46 = scalar_select %p43, %s45, %s32
      %p47 = scmp.ge.s32.totalorder %s46, 2
      %s48 = scalar_select %p47, 0, %s46
      %s49 = sadd.s32 1, %s31
      %s50 = scalar_select %p47, %s49, %s31
      %p51 = scmp.ge.s32.totalorder %s50, 2
      %s52 = scalar_select %p51, 0, %s50
      %s53 = sadd.s32 1, %s30
      %s54 = scalar_select %p51, %s53, %s30
      %p55 = scmp.ge.s32.totalorder %s54, 2
      %s56 = scalar_select %p55, 0, %s54
      %s57 = ssub.s32 %s30, %s56
      %s58 = ssub.s32 %s31, %s52
      %s59 = sor.u32 %s57, %s58
      %s60 = ssub.s32 %s32, %s48
      %s61 = sor.u32 %s59, %s60
      %s62 = ssub.s32 %s33, %s44
      %s63 = sor.u32 %s61, %s62
      %p64 = scmp.eq.s32.totalorder %s63, 0
      %s66 = sadd.s32 %s65, 1
      %s67 = scalar_select %p64, %s65, %s66
      %p70 = pneg %p64
      %p71 = scmp.eq.s32.totalorder %s23, 15
      %p72 = por %p70, %p71
      %p73 = scmp.ne.s32.totalorder %s65, %s68
      %p74 = scmp.eq.s32.totalorder %s23, 0
      %p75 = por %p73, %p74
      %p76 = scmp.ne.s32.totalorder %s65, %s68
      %p77 = scmp.eq.s32.totalorder %s28, 15
      %p78 = por %p76, %p77
      %p79 = scmp.ne.s32.totalorder %s68, %s69
      %p80 = scmp.eq.s32.totalorder %s28, 0
      %p81 = por %p79, %p80
      %p82 = scmp.ne.s32.totalorder %s68, %s69
      %p83 = scmp.eq.s32.totalorder %s29, 15
      %p84 = por %p82, %p83
      %p86 = scmp.ne.s32.totalorder %s69, %s85
      %p87 = scmp.eq.s32.totalorder %s29, 0
      %p88 = por %p86, %p87
      %s90 = sadd.s32 %s89, 1
      %p93 = scmp.eq.s32.totalorder %s23, 15
      %p94 = scmp.ne.s32.totalorder %s89, %s91
      %p95 = scmp.eq.s32.totalorder %s23, 0
      %p96 = por %p94, %p95
      %p97 = scmp.ne.s32.totalorder %s89, %s91
      %p98 = scmp.eq.s32.totalorder %s28, 15
      %p99 = por %p97, %p98
      %p100 = scmp.ne.s32.totalorder %s91, %s92
      %p101 = scmp.eq.s32.totalorder %s28, 0
      %p102 = por %p100, %p101
      %p103 = scmp.ne.s32.totalorder %s91, %s92
      %p104 = scmp.eq.s32.totalorder %s29, 15
      %p105 = por %p103, %p104
      %p107 = scmp.ne.s32.totalorder %s92, %s106
      %p108 = scmp.eq.s32.totalorder %s29, 0
      %p109 = por %p107, %p108
      %s111 = sadd.s32 %s110, 1
      %p114 = scmp.eq.s32.totalorder %s23, 15
      %p115 = scmp.ne.s32.totalorder %s110, %s112
      %p116 = scmp.eq.s32.totalorder %s23, 0
      %p117 = por %p115, %p116
      %p118 = scmp.ne.s32.totalorder %s110, %s112
      %p119 = scmp.eq.s32.totalorder %s28, 15
      %p120 = por %p118, %p119
      %p121 = scmp.ne.s32.totalorder %s112, %s113
      %p122 = scmp.eq.s32.totalorder %s28, 0
      %p123 = por %p121, %p122
      %p124 = scmp.ne.s32.totalorder %s112, %s113
      %p125 = scmp.eq.s32.totalorder %s29, 15
      %p126 = por %p124, %p125
      %p128 = scmp.ne.s32.totalorder %s113, %s127
      %p129 = scmp.eq.s32.totalorder %s29, 0
      %p130 = por %p128, %p129
      %s132 = sadd.s32 %s131, 1
      %p135 = scmp.eq.s32.totalorder %s23, 15
      %p136 = scmp.ne.s32.totalorder %s131, %s133
      %p137 = scmp.eq.s32.totalorder %s23, 0
      %p138 = por %p136, %p137
      %p139 = scmp.ne.s32.totalorder %s131, %s133
      %p140 = scmp.eq.s32.totalorder %s28, 15
      %p141 = por %p139, %p140
      %p142 = scmp.ne.s32.totalorder %s133, %s134
      %p143 = scmp.eq.s32.totalorder %s28, 0
      %p144 = por %p142, %p143
      %p145 = scmp.ne.s32.totalorder %s133, %s134
      %p146 = scmp.eq.s32.totalorder %s29, 15
      %p147 = por %p145, %p146
      %p149 = scmp.ne.s32.totalorder %s134, %s148
      %p150 = scmp.eq.s32.totalorder %s29, 0
      %p151 = por %p149, %p150
      %s153 = sadd.s32 %s152, 1
      %p156 = scmp.eq.s32.totalorder %s23, 15
      %p157 = scmp.ne.s32.totalorder %s152, %s154
      %p158 = scmp.eq.s32.totalorder %s23, 0
      %p159 = por %p157, %p158
      %p160 = scmp.ne.s32.totalorder %s152, %s154
      %p161 = scmp.eq.s32.totalorder %s28, 15
      %p162 = por %p160, %p161
      %p163 = scmp.ne.s32.totalorder %s154, %s155
      %p164 = scmp.eq.s32.totalorder %s28, 0
      %p165 = por %p163, %p164
      %p166 = scmp.ne.s32.totalorder %s154, %s155
      %p167 = scmp.eq.s32.totalorder %s29, 15
      %p168 = por %p166, %p167
      %p170 = scmp.ne.s32.totalorder %s155, %s169
      %p171 = scmp.eq.s32.totalorder %s29, 0
      %p172 = por %p170, %p171
      %s174 = sadd.s32 %s173, 1
      %p177 = scmp.eq.s32.totalorder %s23, 15
      %p178 = scmp.ne.s32.totalorder %s173, %s175
      %p179 = scmp.eq.s32.totalorder %s23, 0
      %p180 = por %p178, %p179
      %p181 = scmp.ne.s32.totalorder %s173, %s175
      %p182 = scmp.eq.s32.totalorder %s28, 15
      %p183 = por %p181, %p182
      %p184 = scmp.ne.s32.totalorder %s175, %s176
      %p185 = scmp.eq.s32.totalorder %s28, 0
      %p186 = por %p184, %p185
      %p187 = scmp.ne.s32.totalorder %s175, %s176
      %p188 = scmp.eq.s32.totalorder %s29, 15
      %p189 = por %p187, %p188
      %p191 = scmp.ne.s32.totalorder %s176, %s190
      %p192 = scmp.eq.s32.totalorder %s29, 0
      %p193 = por %p191, %p192
      %s195 = sadd.s32 %s194, 1
      %p198 = scmp.eq.s32.totalorder %s23, 15
      %p199 = scmp.ne.s32.totalorder %s194, %s196
      %p200 = scmp.eq.s32.totalorder %s23, 0
      %p201 = por %p199, %p200
      %p202 = scmp.ne.s32.totalorder %s194, %s196
      %p203 = scmp.eq.s32.totalorder %s28, 15
      %p204 = por %p202, %p203
      %p205 = scmp.ne.s32.totalorder %s196, %s197
      %p206 = scmp.eq.s32.totalorder %s28, 0
      %p207 = por %p205, %p206
      %p208 = scmp.ne.s32.totalorder %s196, %s197
      %p209 = scmp.eq.s32.totalorder %s29, 15
      %p210 = por %p208, %p209
      %p212 = scmp.ne.s32.totalorder %s197, %s211
      %p213 = scmp.eq.s32.totalorder %s29, 0
      %p214 = por %p212, %p213
      %s216 = sadd.s32 %s215, 1
      %p219 = scmp.eq.s32.totalorder %s23, 15
      %p220 = scmp.ne.s32.totalorder %s215, %s217
      %p221 = scmp.eq.s32.totalorder %s23, 0
      %p222 = por %p220, %p221
      %p223 = scmp.ne.s32.totalorder %s215, %s217
      %p224 = scmp.eq.s32.totalorder %s28, 15
      %p225 = por %p223, %p224
      %p226 = scmp.ne.s32.totalorder %s217, %s218
      %p227 = scmp.eq.s32.totalorder %s28, 0
      %p228 = por %p226, %p227
      %p229 = scmp.ne.s32.totalorder %s217, %s218
      %p230 = scmp.eq.s32.totalorder %s29, 15
      %p231 = por %p229, %p230
      %p233 = scmp.ne.s32.totalorder %s218, %s232
      %p234 = scmp.eq.s32.totalorder %s29, 0
      %p235 = por %p233, %p234
      %s237 = sadd.s32 %s236, 1
      %p240 = scmp.eq.s32.totalorder %s23, 15
      %p241 = scmp.ne.s32.totalorder %s236, %s238
      %p242 = scmp.eq.s32.totalorder %s23, 0
      %p243 = por %p241, %p242
      %p244 = scmp.ne.s32.totalorder %s236, %s238
      %p245 = scmp.eq.s32.totalorder %s28, 15
      %p246 = por %p244, %p245
      %p247 = scmp.ne.s32.totalorder %s238, %s239
      %p248 = scmp.eq.s32.totalorder %s28, 0
      %p249 = por %p247, %p248
      %p250 = scmp.ne.s32.totalorder %s238, %s239
      %p251 = scmp.eq.s32.totalorder %s29, 15
      %p252 = por %p250, %p251
      %p254 = scmp.ne.s32.totalorder %s239, %s253
      %p255 = scmp.eq.s32.totalorder %s29, 0
      %p256 = por %p254, %p255
      %s257 = ssub.s32 %s30, %s56
      %s258 = ssub.s32 %s31, %s52
      %s259 = sor.u32 %s257, %s258
      %s260 = ssub.s32 %s32, %s48
      %s261 = sor.u32 %s259, %s260
      %s262 = ssub.s32 %s33, %s44
      %s263 = sor.u32 %s261, %s262
      %p264 = scmp.eq.s32.totalorder %s263, 0
      %s266 = sadd.s32 %s265, 1
      %s267 = scalar_select %p264, %s265, %s266
      %p270 = pneg %p264
      %p271 = scmp.eq.s32.totalorder %s23, 15
      %p272 = por %p270, %p271
      %p273 = scmp.ne.s32.totalorder %s265, %s268
      %p274 = scmp.eq.s32.totalorder %s23, 0
      %p275 = por %p273, %p274
      %p276 = scmp.ne.s32.totalorder %s265, %s268
      %p277 = scmp.eq.s32.totalorder %s28, 15
      %p278 = por %p276, %p277
      %p279 = scmp.ne.s32.totalorder %s268, %s269
      %p280 = scmp.eq.s32.totalorder %s28, 0
      %p281 = por %p279, %p280
      %p282 = scmp.ne.s32.totalorder %s268, %s269
      %p283 = scmp.eq.s32.totalorder %s29, 15
      %p284 = por %p282, %p283
      %p286 = scmp.ne.s32.totalorder %s269, %s285
      %p287 = scmp.eq.s32.totalorder %s29, 0
      %p288 = por %p286, %p287
      %p289 = scmp.le.s32.totalorder 1, %s23
      %p290 = scmp.lt.s32.totalorder %s23, 17
      %p291 = pnand %p289, %p290
      %p292 = pneg %p291
      // Predicated region
      $region9: #{_lambda_.1} parent=5 // pred_check
        _
      $region10: #{_lambda_.1} parent=5 // pred_check_branch
        %294 = sbr.rel (%p291) target = $region12
      $region11: #{_lambda_.1} parent=5 // pred_region
        %s295 = ssub.s32 %s23, 1
        // Predicated region
        $region13: #{_lambda_.1} parent=11 // pred_check
          %p296 = pneg %p102
        $region14: #{_lambda_.1} parent=11 // pred_check_branch
          %298 = sbr.rel (%p296) target = $region16
        $region15: #{_lambda_.1} parent=11 // pred_region
          _
        $region16: #{_lambda_.1} parent=11 // pred_fallthru
          _
        // Predicated region
        $region17: #{_lambda_.1} parent=11 // pred_check
          %p299 = pneg %p123
        $region18: #{_lambda_.1} parent=11 // pred_check_branch
          %301 = sbr.rel (%p299) target = $region20
        $region19: #{_lambda_.1} parent=11 // pred_region
          _
        $region20: #{_lambda_.1} parent=11 // pred_fallthru
          _
        // Predicated region
        $region21: #{_lambda_.1} parent=11 // pred_check
          %p302 = pneg %p144
        $region22: #{_lambda_.1} parent=11 // pred_check_branch
          %304 = sbr.rel (%p302) target = $region24
        $region23: #{_lambda_.1} parent=11 // pred_region
          _
        $region24: #{_lambda_.1} parent=11 // pred_fallthru
          _
        // Predicated region
        $region25: #{_lambda_.1} parent=11 // pred_check
          %p305 = pneg %p165
        $region26: #{_lambda_.1} parent=11 // pred_check_branch
          %307 = sbr.rel (%p305) target = $region28
        $region27: #{_lambda_.1} parent=11 // pred_region
          %s309 = ssub.s32 512, 512
          %310 = vsyncadd [#allocation6], %s309
          %s311 = sshll.u32 [#allocation5], 4
          %s312 = int_to_ptr.vmem [resolvable:$true] %s311
          %317 = dma.hbm_to_vmem [thread:$0]  %s4, 512, %s312, [#allocation6], 128, 128, 8
        $region28: #{_lambda_.1} parent=11 // pred_fallthru
          _
        // Predicated region
        $region29: #{_lambda_.1} parent=11 // pred_check
          %p318 = pneg %p186
        $region30: #{_lambda_.1} parent=11 // pred_check_branch
          %320 = sbr.rel (%p318) target = $region32
        $region31: #{_lambda_.1} parent=11 // pred_region
          %s322 = ssub.s32 1024, 1024
          %323 = vsyncadd [#allocation6], %s322
          %s324 = sshll.u32 [#allocation7], 4
          %s325 = int_to_ptr.vmem [resolvable:$true] %s324
          %330 = dma.hbm_to_vmem [thread:$0]  %s5, 1024, %s325, [#allocation6], 128, 128, 8
        $region32: #{_lambda_.1} parent=11 // pred_fallthru
          _
        // Predicated region
        $region33: #{_lambda_.1} parent=11 // pred_check
          %p331 = pneg %p207
        $region34: #{_lambda_.1} parent=11 // pred_check_branch
          %333 = sbr.rel (%p331) target = $region36
        $region35: #{_lambda_.1} parent=11 // pred_region
          _
        $region36: #{_lambda_.1} parent=11 // pred_fallthru
          _
        // Predicated region
        $region37: #{_lambda_.1} parent=11 // pred_check
          %p334 = pneg %p228
        $region38: #{_lambda_.1} parent=11 // pred_check_branch
          %336 = sbr.rel (%p334) target = $region40
        $region39: #{_lambda_.1} parent=11 // pred_region
          %s338 = ssub.s32 256, 256
          %339 = vsyncadd [#allocation9], %s338
          %s340 = sshll.u32 [#allocation8], 4
          %s341 = int_to_ptr.vmem [resolvable:$true] %s340
          %346 = dma.hbm_to_vmem [thread:$0]  %s7, 256, %s341, [#allocation9], 64, 64, 4
        $region40: #{_lambda_.1} parent=11 // pred_fallthru
          _
        // Predicated region
        $region41: #{_lambda_.1} parent=11 // pred_check
          %p347 = pneg %p249
        $region42: #{_lambda_.1} parent=11 // pred_check_branch
          %349 = sbr.rel (%p347) target = $region44
        $region43: #{_lambda_.1} parent=11 // pred_region
          _
        $region44: #{_lambda_.1} parent=11 // pred_fallthru
          _
      $region12: #{_lambda_.1} parent=5 // pred_fallthru
        _
      %p350 = scmp.lt.s32.totalorder %s23, 16
      // Predicated region
      $region45: #{_lambda_.1} parent=5 // pred_check
        %p351 = pneg %p350
      $region46: #{_lambda_.1} parent=5 // pred_check_branch
        %353 = sbr.rel (%p351) target = $region48
      $region47: #{_lambda_.1} parent=5 // pred_region
        // Predicated region
        $region49: #{_lambda_.1} parent=47 // pred_check
          %p354 = pneg %p75
        $region50: #{_lambda_.1} parent=47 // pred_check_branch
          %356 = sbr.rel (%p354) target = $region52
        $region51: #{_lambda_.1} parent=47 // pred_region
          #allocation12 [shape = 'u32[6]{0}', space=smem, size = 0x18, scoped, tag = 'DMA stride descriptor']
          %s357 = sand.u32 %s65, 1
          %s358 = scalar_lea.sflag [#allocation3], %s357
          %s359 = sand.u32 %s65, 1
          %s360 = smul.addr %s359, 8
          %s361 = scalar_lea.vmem [#allocation2], %s360
          %s363 = ssub.s32 128, 128
          %364 = vsyncadd %s358, %s363
          %s365 = smul.addr %s32, 4
          %s366 = sadd.s32 %s33, %s365
          %s367 = smul.addr %s31, 16
          %s368 = sadd.s32 %s366, %s367
          %s369 = smul.addr %s30, 32
          %s370 = sadd.s32 %s368, %s369
          %s371 = smul.addr %s370, 32
          %s372 = scalar_lea.hbm %s0, %s371
          %s374 = sshll.u32 1, 14
          %s375 = sxor.u32 4294967295, %s374
          %s377 = sld [smem:[#allocation0]]
          %s378 = sadd.s32 2, %s377
          %s380 = sshll.u32 7, 26
          %s381 = sxor.u32 4294967295, %s380
          %s382 = sand.u32 0, %s381
          %s383 = sshll.u32 %s378, 26
          %s384 = sor.u32 %s382, %s383
          %s385 = sshll.u32 %s361, 4
          %s386 = int_to_ptr.vmem [resolvable:$true] %s385
          %392 = sst [smem:[#allocation12]] 256
          %s393 = scalar_lea.smem [#allocation12], 1
          %394 = sst [smem:[%s393]] 64
          %s395 = scalar_lea.smem [#allocation12], 2
          %396 = sst [smem:[%s395]] 2
          %s397 = scalar_lea.smem [#allocation12], 3
          %398 = sst [smem:[%s397]] 64
          %s399 = scalar_lea.smem [#allocation12], 4
          %400 = sst [smem:[%s399]] 32
          %s401 = scalar_lea.smem [#allocation12], 5
          %402 = sst [smem:[%s401]] 2
          %404 = dma.general %s372, 128, %s386, %s358, [#allocation11], [#allocation12], %s384, 0
        $region52: #{_lambda_.1} parent=47 // pred_fallthru
          _
      $region48: #{_lambda_.1} parent=5 // pred_fallthru
        _
      %p405 = scmp.le.s32.totalorder 1, %s23
      %p406 = scmp.lt.s32.totalorder %s23, 17
      %p407 = pnand %p405, %p406
      %p408 = pneg %p407
      // Predicated region
      $region53: #{_lambda_.1} parent=5 // pred_check
        _
      $region54: #{_lambda_.1} parent=5 // pred_check_branch
        %410 = sbr.rel (%p407) target = $region56
      $region55: #{_lambda_.1} parent=5 // pred_region
        %s411 = ssub.s32 %s23, 1
        %s412 = sand.u32 %s68, 1
        %s413 = scalar_lea.sflag [#allocation3], %s412
        %s414 = sand.u32 %s68, 1
        %s415 = smul.addr %s414, 8
        %s416 = scalar_lea.vmem [#allocation2], %s415
        // Predicated region
        $region57: #{_lambda_.1} parent=55 // pred_check
          %p417 = pneg %p81
        $region58: #{_lambda_.1} parent=55 // pred_check_branch
          %419 = sbr.rel (%p417) target = $region60
        $region59: #{_lambda_.1} parent=55 // pred_region
          %420 = dma.done %s413, 128
        $region60: #{_lambda_.1} parent=55 // pred_fallthru
          _
        // Predicated region
        $region61: #{_lambda_.1} parent=55 // pred_check
          %p421 = pneg %p165
        $region62: #{_lambda_.1} parent=55 // pred_check_branch
          %423 = sbr.rel (%p421) target = $region64
        $region63: #{_lambda_.1} parent=55 // pred_region
          %424 = dma.done [#allocation6], 512
        $region64: #{_lambda_.1} parent=55 // pred_fallthru
          _
        // Predicated region
        $region65: #{_lambda_.1} parent=55 // pred_check
          %p425 = pneg %p186
        $region66: #{_lambda_.1} parent=55 // pred_check_branch
          %427 = sbr.rel (%p425) target = $region68
        $region67: #{_lambda_.1} parent=55 // pred_region
          %428 = dma.done [#allocation6], 1024
        $region68: #{_lambda_.1} parent=55 // pred_fallthru
          _
        // Predicated region
        $region69: #{_lambda_.1} parent=55 // pred_check
          %p429 = pneg %p228
        $region70: #{_lambda_.1} parent=55 // pred_check_branch
          %431 = sbr.rel (%p429) target = $region72
        $region71: #{_lambda_.1} parent=55 // pred_region
          %432 = dma.done [#allocation9], 256
        $region72: #{_lambda_.1} parent=55 // pred_fallthru
          _
        %s433 = sand.u32 %s68, 1
        %s434 = scalar_lea.sflag [#allocation3], %s433
        %s435 = sand.u32 %s68, 1
        %s436 = smul.addr %s435, 8
        %s437 = scalar_lea.vmem [#allocation2], %s436
        %p438 = pneg %p81
        %p439 = pneg %p78
        %p440 = pneg %p102
        %p441 = pneg %p99
        %p442 = pneg %p123
        %p443 = pneg %p120
        %p444 = pneg %p144
        %p445 = pneg %p141
        %p446 = pneg %p165
        %p447 = pneg %p162
        %p448 = pneg %p186
        %p449 = pneg %p183
        %p450 = pneg %p207
        %p451 = pneg %p204
        %p452 = pneg %p228
        %p453 = pneg %p225
        %p454 = pneg %p249
        %p455 = pneg %p246
        %p456 = pneg %p281
        %p457 = pneg %p278
        %s458 = sand.u32 %s268, 1
        %s459 = scalar_lea.sflag [#allocation4], %s458
        %s460 = sand.u32 %s268, 1
        %s461 = smul.addr %s460, 8
        %s462 = scalar_lea.vmem [#allocation10], %s461
        %v464 = vld [vmem:[%s416] sm:$0x3]
        %s465 = scalar_lea.vmem %s416, 2 [#allocation2]
        %v466 = vld [vmem:[%s465] sm:$0x3]
        %s467 = scalar_lea.vmem %s416, 4 [#allocation2]
        %v468 = vld [vmem:[%s467] sm:$0x3]
        %s469 = scalar_lea.vmem %s416, 6 [#allocation2]
        %v470 = vld [vmem:[%s469] sm:$0x3]
        %v472 = vrot.slane %v466, 6
        %v475 = vrot.slane %v468, 4
        %v478 = vrot.slane %v470, 2
        %vm480 = vcmask 1041408
        %v481 = vsel %vm480, %v464, %v472
        %vm482 = vcmask 1043456
        %v483 = vsel %vm482, %v481, %v475
        %vm484 = vcmask 1045504
        %v485 = vsel %vm484, %v483, %v478
        %v486 = vpack.c.bf16 %v485, %v485
        %v487 = vld [vmem:[%s1] sm:$0xf]
        %v488 = vld [vmem:[%s1 + $0x4] sm:$0xf]
        %v489 = vld [vmem:[%s1 + $0x8] sm:$0xf]
        %v490 = vld [vmem:[%s1 + $0xc] sm:$0xf]
        %v495 = vunpack.c.l.b16 %v487
        %v496 = vunpack.c.l.b16 %v488
        %v497 = vunpack.c.l.b16 %v489
        %v498 = vunpack.c.l.b16 %v490
        %v499 = vpack.c.b16 %v496, %v495
        %v500 = vpack.c.b16 %v498, %v497
        %vm503 = vcmask 261120
        %v505 = vsel %vm503, %v486, 0
        %507 = vmatprep.subr.bf16.mxu0 0
        %508 = vmatpush1.bf16.msra.mxu0 %v499
        %509 = vmatprep.subr.bf16.mxu0 0
        %510 = vmatpush1.bf16.msra.mxu0 %v500
        %511 = vmatprep.subr.bf16.mxu0 0
        %512 = vmatpush1.bf16.msra.mxu0 0
        %513 = vmatprep.subr.bf16.mxu0 0
        %514 = vmatpush1.bf16.msra.mxu0 0
        %515 = vmatprep.subr.bf16.mxu0 0
        %516 = vmatpush1.bf16.msra.mxu0 0
        %517 = vmatprep.subr.bf16.mxu0 0
        %518 = vmatpush1.bf16.msra.mxu0 0
        %519 = vmatprep.subr.bf16.mxu0 0
        %520 = vmatpush1.bf16.msra.mxu0 0
        %521 = vmatprep.subr.bf16.mxu0 0
        %522 = vmatpush1.bf16.msra.mxu0 0
        %523 = vmatprep.subr.bf16.mxu0 0
        %524 = vmatpush1.bf16.msra.mxu0 0
        %525 = vmatprep.subr.bf16.mxu0 0
        %526 = vmatpush1.bf16.msra.mxu0 0
        %527 = vmatprep.subr.bf16.mxu0 0
        %528 = vmatpush1.bf16.msra.mxu0 0
        %529 = vmatprep.subr.bf16.mxu0 0
        %530 = vmatpush1.bf16.msra.mxu0 0
        %531 = vmatprep.subr.bf16.mxu0 0
        %532 = vmatpush1.bf16.msra.mxu0 0
        %533 = vmatprep.subr.bf16.mxu0 0
        %534 = vmatpush1.bf16.msra.mxu0 0
        %535 = vmatprep.subr.bf16.mxu0 0
        %536 = vmatpush1.bf16.msra.mxu0 0
        %537 = vmatprep.subr.bf16.mxu0 0
        %538 = vmatpush1.bf16.msra.mxu0 0
        %539 = vmatprep.mubr.bf16.mxu0 0
        %540 = vmatmul.mubr.bf16.gmra.mrb[0].mxu0 %v505
        %v541 = vpop.f32.mrb[0].mxu0
        %v542 = vadd.f32 0.0, %v541
        %v543 = vpop.f32.mrb[0].mxu0
        %v544 = vpop.f32.mrb[0].mxu0
        %v545 = vpop.f32.mrb[0].mxu0
        %546 = vdwg.mxu0
        %v547 = vld [vmem:[%s2] sm:$0xff]
        %549 = vrot.lane.b32.xlu0 %v547, 32
        %v550 = vpop.permute.xlu0 %549
        %v552 = vadd.f32 %v542, %v550
        %v553 = vld [vmem:[%s3] sm:$0x1]
        %v554 = vmax.f32 %v542, 0.0
        %v555 = vadd.f32 %v554, 1e-06
        %v557 = vlaneseq
        %v558 = vshrl.u32 %v557, 7
        %v559 = vsub.s32 0, %v558
        %v560 = vrot.slane %v553, %v559
        %v562 = vmul.f32 %v555, %v560
        %v563 = vmax.f32 %v552, 0.0
        %v564 = vadd.f32 %v563, 1e-06
        %565 = vrot.lane.b32.xlu0 %v560, 32
        %v566 = vpop.permute.xlu0 %565
        %v568 = vmul.f32 %v564, %v566
        %v569 = vld [vmem:[#allocation5] sm:$0xff]
        %v570 = vld [vmem:[#allocation5 + $0x8] sm:$0xff]
        %v571 = vld [vmem:[#allocation5 + $0x10] sm:$0xff]
        %v572 = vld [vmem:[#allocation5 + $0x18] sm:$0xff]
        %v573 = vmul.f32 %v562, %v562
        %v575 = vsel %vm503, %v573, 0
        %577 = vmatprep.subr.mxu0 0.0
        %578 = vmatpush1.msra.mxu0 %v569
        %579 = vmatprep.subr.mxu0 0.0
        %580 = vmatpush1.msra.mxu0 %v570
        %581 = vmatprep.subr.mxu0 0.0
        %582 = vmatpush1.msra.mxu0 %v571
        %583 = vmatprep.subr.mxu0 0.0
        %584 = vmatpush1.msra.mxu0 %v572
        %585 = vmatprep.subr.mxu0 0.0
        %586 = vmatpush1.msra.mxu0 0.0
        %587 = vmatprep.subr.mxu0 0.0
        %588 = vmatpush1.msra.mxu0 0.0
        %589 = vmatprep.subr.mxu0 0.0
        %590 = vmatpush1.msra.mxu0 0.0
        %591 = vmatprep.subr.mxu0 0.0
        %592 = vmatpush1.msra.mxu0 0.0
        %593 = vmatprep.subr.mxu0 0.0
        %594 = vmatpush1.msra.mxu0 0.0
        %595 = vmatprep.subr.mxu0 0.0
        %596 = vmatpush1.msra.mxu0 0.0
        %597 = vmatprep.subr.mxu0 0.0
        %598 = vmatpush1.msra.mxu0 0.0
        %599 = vmatprep.subr.mxu0 0.0
        %600 = vmatpush1.msra.mxu0 0.0
        %601 = vmatprep.subr.mxu0 0.0
        %602 = vmatpush1.msra.mxu0 0.0
        %603 = vmatprep.subr.mxu0 0.0
        %604 = vmatpush1.msra.mxu0 0.0
        %605 = vmatprep.subr.mxu0 0.0
        %606 = vmatpush1.msra.mxu0 0.0
        %607 = vmatprep.subr.mxu0 0.0
        %608 = vmatpush1.msra.mxu0 0.0
        %609 = vmatprep.subr.mxu0 0.0
        %610 = vmatpush1.msra.mxu0 0.0
        %611 = vmatprep.subr.mxu0 0.0
        %612 = vmatpush1.msra.mxu0 0.0
        %613 = vmatprep.subr.mxu0 0.0
        %614 = vmatpush1.msra.mxu0 0.0
        %615 = vmatprep.subr.mxu0 0.0
        %616 = vmatpush1.msra.mxu0 0.0
        %617 = vmatprep.subr.mxu0 0.0
        %618 = vmatpush1.msra.mxu0 0.0
        %619 = vmatprep.subr.mxu0 0.0
        %620 = vmatpush1.msra.mxu0 0.0
        %621 = vmatprep.subr.mxu0 0.0
        %622 = vmatpush1.msra.mxu0 0.0
        %623 = vmatprep.subr.mxu0 0.0
        %624 = vmatpush1.msra.mxu0 0.0
        %625 = vmatprep.subr.mxu0 0.0
        %626 = vmatpush1.msra.mxu0 0.0
        %627 = vmatprep.subr.mxu0 0.0
        %628 = vmatpush1.msra.mxu0 0.0
        %629 = vmatprep.subr.mxu0 0.0
        %630 = vmatpush1.msra.mxu0 0.0
        %631 = vmatprep.subr.mxu0 0.0
        %632 = vmatpush1.msra.mxu0 0.0
        %633 = vmatprep.subr.mxu0 0.0
        %634 = vmatpush1.msra.mxu0 0.0
        %635 = vmatprep.subr.mxu0 0.0
        %636 = vmatpush1.msra.mxu0 0.0
        %637 = vmatprep.subr.mxu0 0.0
        %638 = vmatpush1.msra.mxu0 0.0
        %639 = vmatprep.subr.mxu0 0.0
        %640 = vmatpush1.msra.mxu0 0.0
        %641 = vmatprep.mubr.f32.mxu0 0.0
        %642 = vmatmul.mubr.f32.gmra.mrb[0].mxu0 %v575
        %v643 = vpop.f32.mrb[0].mxu0
        %v644 = vadd.f32 0.0, %v643
        %v645 = vpop.f32.mrb[0].mxu0
        %646 = vdwg.mxu0
        %v647 = vmul.f32 %v568, %v568
        %649 = vrot.lane.b32.xlu0 %v647, 96
        %v650 = vpop.permute.xlu0 %649
        %v651 = vsel %vm503, %v650, 0
        %653 = vmatprep.subr.mxu0 0.0
        %654 = vmatpush1.msra.mxu0 %v569
        %655 = vmatprep.subr.mxu0 0.0
        %656 = vmatpush1.msra.mxu0 %v570
        %657 = vmatprep.subr.mxu0 0.0
        %658 = vmatpush1.msra.mxu0 %v571
        %659 = vmatprep.subr.mxu0 0.0
        %660 = vmatpush1.msra.mxu0 %v572
        %661 = vmatprep.subr.mxu0 0.0
        %662 = vmatpush1.msra.mxu0 0.0
        %663 = vmatprep.subr.mxu0 0.0
        %664 = vmatpush1.msra.mxu0 0.0
        %665 = vmatprep.subr.mxu0 0.0
        %666 = vmatpush1.msra.mxu0 0.0
        %667 = vmatprep.subr.mxu0 0.0
        %668 = vmatpush1.msra.mxu0 0.0
        %669 = vmatprep.subr.mxu0 0.0
        %670 = vmatpush1.msra.mxu0 0.0
        %671 = vmatprep.subr.mxu0 0.0
        %672 = vmatpush1.msra.mxu0 0.0
        %673 = vmatprep.subr.mxu0 0.0
        %674 = vmatpush1.msra.mxu0 0.0
        %675 = vmatprep.subr.mxu0 0.0
        %676 = vmatpush1.msra.mxu0 0.0
        %677 = vmatprep.subr.mxu0 0.0
        %678 = vmatpush1.msra.mxu0 0.0
        %679 = vmatprep.subr.mxu0 0.0
        %680 = vmatpush1.msra.mxu0 0.0
        %681 = vmatprep.subr.mxu0 0.0
        %682 = vmatpush1.msra.mxu0 0.0
        %683 = vmatprep.subr.mxu0 0.0
        %684 = vmatpush1.msra.mxu0 0.0
        %685 = vmatprep.subr.mxu0 0.0
        %686 = vmatpush1.msra.mxu0 0.0
        %687 = vmatprep.subr.mxu0 0.0
        %688 = vmatpush1.msra.mxu0 0.0
        %689 = vmatprep.subr.mxu0 0.0
        %690 = vmatpush1.msra.mxu0 0.0
        %691 = vmatprep.subr.mxu0 0.0
        %692 = vmatpush1.msra.mxu0 0.0
        %693 = vmatprep.subr.mxu0 0.0
        %694 = vmatpush1.msra.mxu0 0.0
        %695 = vmatprep.subr.mxu0 0.0
        %696 = vmatpush1.msra.mxu0 0.0
        %697 = vmatprep.subr.mxu0 0.0
        %698 = vmatpush1.msra.mxu0 0.0
        %699 = vmatprep.subr.mxu0 0.0
        %700 = vmatpush1.msra.mxu0 0.0
        %701 = vmatprep.subr.mxu0 0.0
        %702 = vmatpush1.msra.mxu0 0.0
        %703 = vmatprep.subr.mxu0 0.0
        %704 = vmatpush1.msra.mxu0 0.0
        %705 = vmatprep.subr.mxu0 0.0
        %706 = vmatpush1.msra.mxu0 0.0
        %707 = vmatprep.subr.mxu0 0.0
        %708 = vmatpush1.msra.mxu0 0.0
        %709 = vmatprep.subr.mxu0 0.0
        %710 = vmatpush1.msra.mxu0 0.0
        %711 = vmatprep.subr.mxu0 0.0
        %712 = vmatpush1.msra.mxu0 0.0
        %713 = vmatprep.subr.mxu0 0.0
        %714 = vmatpush1.msra.mxu0 0.0
        %715 = vmatprep.subr.mxu0 0.0
        %716 = vmatpush1.msra.mxu0 0.0
        %717 = vmatprep.mubr.f32.mxu0 0.0
        %718 = vmatmul.mubr.f32.gmra.mrb[0].mxu0 %v651
        %v719 = vpop.f32.mrb[0].mxu0
        %v720 = vadd.f32 0.0, %v719
        %v721 = vpop.f32.mrb[0].mxu0
        %722 = vdwg.mxu0
        %v723 = vmul.f32 %v573, %v562
        %v724 = vmul.f32 %v647, %v568
        %v725 = vmul.f32 %v723, %v723
        %v727 = vsel %vm503, %v725, 0
        %729 = vmatprep.subr.mxu0 0.0
        %730 = vmatpush1.msra.mxu0 %v569
        %731 = vmatprep.subr.mxu0 0.0
        %732 = vmatpush1.msra.mxu0 %v570
        %733 = vmatprep.subr.mxu0 0.0
        %734 = vmatpush1.msra.mxu0 %v571
        %735 = vmatprep.subr.mxu0 0.0
        %736 = vmatpush1.msra.mxu0 %v572
        %737 = vmatprep.subr.mxu0 0.0
        %738 = vmatpush1.msra.mxu0 0.0
        %739 = vmatprep.subr.mxu0 0.0
        %740 = vmatpush1.msra.mxu0 0.0
        %741 = vmatprep.subr.mxu0 0.0
        %742 = vmatpush1.msra.mxu0 0.0
        %743 = vmatprep.subr.mxu0 0.0
        %744 = vmatpush1.msra.mxu0 0.0
        %745 = vmatprep.subr.mxu0 0.0
        %746 = vmatpush1.msra.mxu0 0.0
        %747 = vmatprep.subr.mxu0 0.0
        %748 = vmatpush1.msra.mxu0 0.0
        %749 = vmatprep.subr.mxu0 0.0
        %750 = vmatpush1.msra.mxu0 0.0
        %751 = vmatprep.subr.mxu0 0.0
        %752 = vmatpush1.msra.mxu0 0.0
        %753 = vmatprep.subr.mxu0 0.0
        %754 = vmatpush1.msra.mxu0 0.0
        %755 = vmatprep.subr.mxu0 0.0
        %756 = vmatpush1.msra.mxu0 0.0
        %757 = vmatprep.subr.mxu0 0.0
        %758 = vmatpush1.msra.mxu0 0.0
        %759 = vmatprep.subr.mxu0 0.0
        %760 = vmatpush1.msra.mxu0 0.0
        %761 = vmatprep.subr.mxu0 0.0
        %762 = vmatpush1.msra.mxu0 0.0
        %763 = vmatprep.subr.mxu0 0.0
        %764 = vmatpush1.msra.mxu0 0.0
        %765 = vmatprep.subr.mxu0 0.0
        %766 = vmatpush1.msra.mxu0 0.0
        %767 = vmatprep.subr.mxu0 0.0
        %768 = vmatpush1.msra.mxu0 0.0
        %769 = vmatprep.subr.mxu0 0.0
        %770 = vmatpush1.msra.mxu0 0.0
        %771 = vmatprep.subr.mxu0 0.0
        %772 = vmatpush1.msra.mxu0 0.0
        %773 = vmatprep.subr.mxu0 0.0
        %774 = vmatpush1.msra.mxu0 0.0
        %775 = vmatprep.subr.mxu0 0.0
        %776 = vmatpush1.msra.mxu0 0.0
        %777 = vmatprep.subr.mxu0 0.0
        %778 = vmatpush1.msra.mxu0 0.0
        %779 = vmatprep.subr.mxu0 0.0
        %780 = vmatpush1.msra.mxu0 0.0
        %781 = vmatprep.subr.mxu0 0.0
        %782 = vmatpush1.msra.mxu0 0.0
        %783 = vmatprep.subr.mxu0 0.0
        %784 = vmatpush1.msra.mxu0 0.0
        %785 = vmatprep.subr.mxu0 0.0
        %786 = vmatpush1.msra.mxu0 0.0
        %787 = vmatprep.subr.mxu0 0.0
        %788 = vmatpush1.msra.mxu0 0.0
        %789 = vmatprep.subr.mxu0 0.0
        %790 = vmatpush1.msra.mxu0 0.0
        %791 = vmatprep.subr.mxu0 0.0
        %792 = vmatpush1.msra.mxu0 0.0
        %793 = vmatprep.mubr.f32.mxu0 0.0
        %794 = vmatmul.mubr.f32.gmra.mrb[0].mxu0 %v727
        %v795 = vpop.f32.mrb[0].mxu0
        %v796 = vadd.f32 0.0, %v795
        %v797 = vpop.f32.mrb[0].mxu0
        %798 = vdwg.mxu0
        %v799 = vmul.f32 %v724, %v724
        %801 = vrot.lane.b32.xlu0 %v799, 96
        %v802 = vpop.permute.xlu0 %801
        %v803 = vsel %vm503, %v802, 0
        %805 = vmatprep.subr.mxu0 0.0
        %806 = vmatpush1.msra.mxu0 %v569
        %807 = vmatprep.subr.mxu0 0.0
        %808 = vmatpush1.msra.mxu0 %v570
        %809 = vmatprep.subr.mxu0 0.0
        %810 = vmatpush1.msra.mxu0 %v571
        %811 = vmatprep.subr.mxu0 0.0
        %812 = vmatpush1.msra.mxu0 %v572
        %813 = vmatprep.subr.mxu0 0.0
        %814 = vmatpush1.msra.mxu0 0.0
        %815 = vmatprep.subr.mxu0 0.0
        %816 = vmatpush1.msra.mxu0 0.0
        %817 = vmatprep.subr.mxu0 0.0
        %818 = vmatpush1.msra.mxu0 0.0
        %819 = vmatprep.subr.mxu0 0.0
        %820 = vmatpush1.msra.mxu0 0.0
        %821 = vmatprep.subr.mxu0 0.0
        %822 = vmatpush1.msra.mxu0 0.0
        %823 = vmatprep.subr.mxu0 0.0
        %824 = vmatpush1.msra.mxu0 0.0
        %825 = vmatprep.subr.mxu0 0.0
        %826 = vmatpush1.msra.mxu0 0.0
        %827 = vmatprep.subr.mxu0 0.0
        %828 = vmatpush1.msra.mxu0 0.0
        %829 = vmatprep.subr.mxu0 0.0
        %830 = vmatpush1.msra.mxu0 0.0
        %831 = vmatprep.subr.mxu0 0.0
        %832 = vmatpush1.msra.mxu0 0.0
        %833 = vmatprep.subr.mxu0 0.0
        %834 = vmatpush1.msra.mxu0 0.0
        %835 = vmatprep.subr.mxu0 0.0
        %836 = vmatpush1.msra.mxu0 0.0
        %837 = vmatprep.subr.mxu0 0.0
        %838 = vmatpush1.msra.mxu0 0.0
        %839 = vmatprep.subr.mxu0 0.0
        %840 = vmatpush1.msra.mxu0 0.0
        %841 = vmatprep.subr.mxu0 0.0
        %842 = vmatpush1.msra.mxu0 0.0
        %843 = vmatprep.subr.mxu0 0.0
        %844 = vmatpush1.msra.mxu0 0.0
        %845 = vmatprep.subr.mxu0 0.0
        %846 = vmatpush1.msra.mxu0 0.0
        %847 = vmatprep.subr.mxu0 0.0
        %848 = vmatpush1.msra.mxu0 0.0
        %849 = vmatprep.subr.mxu0 0.0
        %850 = vmatpush1.msra.mxu0 0.0
        %851 = vmatprep.subr.mxu0 0.0
        %852 = vmatpush1.msra.mxu0 0.0
        %853 = vmatprep.subr.mxu0 0.0
        %854 = vmatpush1.msra.mxu0 0.0
        %855 = vmatprep.subr.mxu0 0.0
        %856 = vmatpush1.msra.mxu0 0.0
        %857 = vmatprep.subr.mxu0 0.0
        %858 = vmatpush1.msra.mxu0 0.0
        %859 = vmatprep.subr.mxu0 0.0
        %860 = vmatpush1.msra.mxu0 0.0
        %861 = vmatprep.subr.mxu0 0.0
        %862 = vmatpush1.msra.mxu0 0.0
        %863 = vmatprep.subr.mxu0 0.0
        %864 = vmatpush1.msra.mxu0 0.0
        %865 = vmatprep.subr.mxu0 0.0
        %866 = vmatpush1.msra.mxu0 0.0
        %867 = vmatprep.subr.mxu0 0.0
        %868 = vmatpush1.msra.mxu0 0.0
        %869 = vmatprep.mubr.f32.mxu0 0.0
        %870 = vmatmul.mubr.f32.gmra.mrb[0].mxu0 %v803
        %v871 = vpop.f32.mrb[0].mxu0
        %v872 = vadd.f32 0.0, %v871
        %v873 = vpop.f32.mrb[0].mxu0
        %874 = vdwg.mxu0
        %v875 = vrsqrt.pop %v644
        %v876 = vmul.f32 %v644, %v875
        %vm877 = vcmp.eq.f32.partialorder %v644, inf
        %v878 = vsel %vm877, %v644, %v876
        %vm879 = vcmp.eq.f32.partialorder %v644, 0.0
        %v880 = vand.u32 %v644, 2147483648
        %v881 = vsel %vm879, %v880, %v878
        %v882 = vrsqrt.pop %v796
        %v883 = vmul.f32 %v881, %v882
        %v884 = vmul.f32 %v723, %v883
        %v885 = vrsqrt.pop %v720
        %v886 = vmul.f32 %v720, %v885
        %vm887 = vcmp.eq.f32.partialorder %v720, inf
        %v888 = vsel %vm887, %v720, %v886
        %vm889 = vcmp.eq.f32.partialorder %v720, 0.0
        %v890 = vand.u32 %v720, 2147483648
        %v891 = vsel %vm889, %v890, %v888
        %v892 = vrsqrt.pop %v872
        %v893 = vmul.f32 %v891, %v892
        %895 = vrot.lane.b32.xlu0 %v893, 32
        %v896 = vpop.permute.xlu0 %895
        %v898 = vmul.f32 %v724, %v896
        %vm899 = vcmask 523520
        %v900 = vsel %vm899, %v898, 0.0
        %v901 = vrot.slane %v900, 4
        %v902 = vadd.f32 %v900, %v901
        %v903 = vrot.slane %v902, 2
        %v904 = vadd.f32 %v902, %v903
        %v905 = vrot.slane %v904, 1
        %v906 = vadd.f32 %v904, %v905
        %908 = vrot.lane.b32.xlu0 %v906, 96
        %v909 = vpop.permute.xlu0 %908
        %v911 = vmul.f32 %v884, %v909
        %v913 = vsel %vm503, %v911, 0
        %915 = vmatprep.subr.mxu0 0.0
        %916 = vmatpush1.msra.mxu0 %v569
        %917 = vmatprep.subr.mxu0 0.0
        %918 = vmatpush1.msra.mxu0 %v570
        %919 = vmatprep.subr.mxu0 0.0
        %920 = vmatpush1.msra.mxu0 %v571
        %921 = vmatprep.subr.mxu0 0.0
        %922 = vmatpush1.msra.mxu0 %v572
        %923 = vmatprep.subr.mxu0 0.0
        %924 = vmatpush1.msra.mxu0 0.0
        %925 = vmatprep.subr.mxu0 0.0
        %926 = vmatpush1.msra.mxu0 0.0
        %927 = vmatprep.subr.mxu0 0.0
        %928 = vmatpush1.msra.mxu0 0.0
        %929 = vmatprep.subr.mxu0 0.0
        %930 = vmatpush1.msra.mxu0 0.0
        %931 = vmatprep.subr.mxu0 0.0
        %932 = vmatpush1.msra.mxu0 0.0
        %933 = vmatprep.subr.mxu0 0.0
        %934 = vmatpush1.msra.mxu0 0.0
        %935 = vmatprep.subr.mxu0 0.0
        %936 = vmatpush1.msra.mxu0 0.0
        %937 = vmatprep.subr.mxu0 0.0
        %938 = vmatpush1.msra.mxu0 0.0
        %939 = vmatprep.subr.mxu0 0.0
        %940 = vmatpush1.msra.mxu0 0.0
        %941 = vmatprep.subr.mxu0 0.0
        %942 = vmatpush1.msra.mxu0 0.0
        %943 = vmatprep.subr.mxu0 0.0
        %944 = vmatpush1.msra.mxu0 0.0
        %945 = vmatprep.subr.mxu0 0.0
        %946 = vmatpush1.msra.mxu0 0.0
        %947 = vmatprep.subr.mxu0 0.0
        %948 = vmatpush1.msra.mxu0 0.0
        %949 = vmatprep.subr.mxu0 0.0
        %950 = vmatpush1.msra.mxu0 0.0
        %951 = vmatprep.subr.mxu0 0.0
        %952 = vmatpush1.msra.mxu0 0.0
        %953 = vmatprep.subr.mxu0 0.0
        %954 = vmatpush1.msra.mxu0 0.0
        %955 = vmatprep.subr.mxu0 0.0
        %956 = vmatpush1.msra.mxu0 0.0
        %957 = vmatprep.subr.mxu0 0.0
        %958 = vmatpush1.msra.mxu0 0.0
        %959 = vmatprep.subr.mxu0 0.0
        %960 = vmatpush1.msra.mxu0 0.0
        %961 = vmatprep.subr.mxu0 0.0
        %962 = vmatpush1.msra.mxu0 0.0
        %963 = vmatprep.subr.mxu0 0.0
        %964 = vmatpush1.msra.mxu0 0.0
        %965 = vmatprep.subr.mxu0 0.0
        %966 = vmatpush1.msra.mxu0 0.0
        %967 = vmatprep.subr.mxu0 0.0
        %968 = vmatpush1.msra.mxu0 0.0
        %969 = vmatprep.subr.mxu0 0.0
        %970 = vmatpush1.msra.mxu0 0.0
        %971 = vmatprep.subr.mxu0 0.0
        %972 = vmatpush1.msra.mxu0 0.0
        %973 = vmatprep.subr.mxu0 0.0
        %974 = vmatpush1.msra.mxu0 0.0
        %975 = vmatprep.subr.mxu0 0.0
        %976 = vmatpush1.msra.mxu0 0.0
        %977 = vmatprep.subr.mxu0 0.0
        %978 = vmatpush1.msra.mxu0 0.0
        %979 = vmatprep.mubr.f32.mxu0 0.0
        %980 = vmatmul.mubr.f32.gmra.mrb[0].mxu0 %v913
        %v981 = vpop.f32.mrb[0].mxu0
        %v982 = vadd.f32 1e-06, %v981
        %v983 = vpop.f32.mrb[0].mxu0
        %984 = vdwg.mxu0
        %v985 = vrcp.pop %v982
        %v986 = vmul.f32 1.0, %v985
        %988 = vrot.lane.b32.xlu0 %v898, 96
        %v989 = vpop.permute.xlu0 %988
        %vm990 = vcmask 64512
        %v992 = vsel %vm990, %v884, 0
        %v994 = vsel %vm990, %v989, 0
        %996 = vmatprep.subr.mxu0 0.0
        %997 = vmatpush1.xpose.msra.mxu0 %v994
        %998 = vmatprep.subr.mxu0 0.0
        %999 = vmatpush1.xpose.msra.mxu0 0.0
        %1000 = vmatprep.subr.mxu0 0.0
        %1001 = vmatpush1.xpose.msra.mxu0 0.0
        %1002 = vmatprep.subr.mxu0 0.0
        %1003 = vmatpush1.xpose.msra.mxu0 0.0
        %1004 = vmatprep.subr.mxu0 0.0
        %1005 = vmatpush1.xpose.msra.mxu0 0.0
        %1006 = vmatprep.subr.mxu0 0.0
        %1007 = vmatpush1.xpose.msra.mxu0 0.0
        %1008 = vmatprep.subr.mxu0 0.0
        %1009 = vmatpush1.xpose.msra.mxu0 0.0
        %1010 = vmatprep.subr.mxu0 0.0
        %1011 = vmatpush1.xpose.msra.mxu0 0.0
        %1012 = vmatprep.subr.mxu0 0.0
        %1013 = vmatpush1.xpose.msra.mxu0 0.0
        %1014 = vmatprep.subr.mxu0 0.0
        %1015 = vmatpush1.xpose.msra.mxu0 0.0
        %1016 = vmatprep.subr.mxu0 0.0
        %1017 = vmatpush1.xpose.msra.mxu0 0.0
        %1018 = vmatprep.subr.mxu0 0.0
        %1019 = vmatpush1.xpose.msra.mxu0 0.0
        %1020 = vmatprep.subr.mxu0 0.0
        %1021 = vmatpush1.xpose.msra.mxu0 0.0
        %1022 = vmatprep.subr.mxu0 0.0
        %1023 = vmatpush1.xpose.msra.mxu0 0.0
        %1024 = vmatprep.subr.mxu0 0.0
        %1025 = vmatpush1.xpose.msra.mxu0 0.0
        %1026 = vmatprep.subr.mxu0 0.0
        %1027 = vmatpush1.xpose.msra.mxu0 0.0
        %1028 = vmatprep.subr.mxu0 0.0
        %1029 = vmatpush1.xpose.msra.mxu0 0.0
        %1030 = vmatprep.subr.mxu0 0.0
        %1031 = vmatpush1.xpose.msra.mxu0 0.0
        %1032 = vmatprep.subr.mxu0 0.0
        %1033 = vmatpush1.xpose.msra.mxu0 0.0
        %1034 = vmatprep.subr.mxu0 0.0
        %1035 = vmatpush1.xpose.msra.mxu0 0.0
        %1036 = vmatprep.subr.mxu0 0.0
        %1037 = vmatpush1.xpose.msra.mxu0 0.0
        %1038 = vmatprep.subr.mxu0 0.0
        %1039 = vmatpush1.xpose.msra.mxu0 0.0
        %1040 = vmatprep.subr.mxu0 0.0
        %1041 = vmatpush1.xpose.msra.mxu0 0.0
        %1042 = vmatprep.subr.mxu0 0.0
        %1043 = vmatpush1.xpose.msra.mxu0 0.0
        %1044 = vmatprep.subr.mxu0 0.0
        %1045 = vmatpush1.xpose.msra.mxu0 0.0
        %1046 = vmatprep.subr.mxu0 0.0
        %1047 = vmatpush1.xpose.msra.mxu0 0.0
        %1048 = vmatprep.subr.mxu0 0.0
        %1049 = vmatpush1.xpose.msra.mxu0 0.0
        %1050 = vmatprep.subr.mxu0 0.0
        %1051 = vmatpush1.xpose.msra.mxu0 0.0
        %1052 = vmatprep.subr.mxu0 0.0
        %1053 = vmatpush1.xpose.msra.mxu0 0.0
        %1054 = vmatprep.subr.mxu0 0.0
        %1055 = vmatpush1.xpose.msra.mxu0 0.0
        %1056 = vmatprep.subr.mxu0 0.0
        %1057 = vmatpush1.xpose.msra.mxu0 0.0
        %1058 = vmatprep.subr.mxu0 0.0
        %1059 = vmatpush1.xpose.msra.mxu0 0.0
        %1060 = vmatprep.mubr.f32.mxu0 0.0
        %1061 = vmatmul.mubr.f32.gmra.mrb[0].mxu0 %v992
        %v1062 = vpop.f32.mrb[0].mxu0
        %v1063 = vadd.f32 0.0, %v1062
        %v1064 = vpop.f32.mrb[0].mxu0
        %1065 = vdwg.mxu0
        %1067 = vrot.lane.b32.xlu0 %v542, 64
        %v1068 = vpop.permute.xlu0 %1067
        %v1071 = vsel %vm990, %v1063, 0
        %1073 = vmatprep.subr.mxu0 0.0
        %1074 = vmatpush1.msra.mxu0 %v1068
        %1075 = vmatprep.subr.mxu0 0.0
        %1076 = vmatpush1.msra.mxu0 0.0
        %1077 = vmatprep.subr.mxu0 0.0
        %1078 = vmatpush1.msra.mxu0 0.0
        %1079 = vmatprep.subr.mxu0 0.0
        %1080 = vmatpush1.msra.mxu0 0.0
        %1081 = vmatprep.subr.mxu0 0.0
        %1082 = vmatpush1.msra.mxu0 0.0
        %1083 = vmatprep.subr.mxu0 0.0
        %1084 = vmatpush1.msra.mxu0 0.0
        %1085 = vmatprep.subr.mxu0 0.0
        %1086 = vmatpush1.msra.mxu0 0.0
        %1087 = vmatprep.subr.mxu0 0.0
        %1088 = vmatpush1.msra.mxu0 0.0
        %1089 = vmatprep.subr.mxu0 0.0
        %1090 = vmatpush1.msra.mxu0 0.0
        %1091 = vmatprep.subr.mxu0 0.0
        %1092 = vmatpush1.msra.mxu0 0.0
        %1093 = vmatprep.subr.mxu0 0.0
        %1094 = vmatpush1.msra.mxu0 0.0
        %1095 = vmatprep.subr.mxu0 0.0
        %1096 = vmatpush1.msra.mxu0 0.0
        %1097 = vmatprep.subr.mxu0 0.0
        %1098 = vmatpush1.msra.mxu0 0.0
        %1099 = vmatprep.subr.mxu0 0.0
        %1100 = vmatpush1.msra.mxu0 0.0
        %1101 = vmatprep.subr.mxu0 0.0
        %1102 = vmatpush1.msra.mxu0 0.0
        %1103 = vmatprep.subr.mxu0 0.0
        %1104 = vmatpush1.msra.mxu0 0.0
        %1105 = vmatprep.subr.mxu0 0.0
        %1106 = vmatpush1.msra.mxu0 0.0
        %1107 = vmatprep.subr.mxu0 0.0
        %1108 = vmatpush1.msra.mxu0 0.0
        %1109 = vmatprep.subr.mxu0 0.0
        %1110 = vmatpush1.msra.mxu0 0.0
        %1111 = vmatprep.subr.mxu0 0.0
        %1112 = vmatpush1.msra.mxu0 0.0
        %1113 = vmatprep.subr.mxu0 0.0
        %1114 = vmatpush1.msra.mxu0 0.0
        %1115 = vmatprep.subr.mxu0 0.0
        %1116 = vmatpush1.msra.mxu0 0.0
        %1117 = vmatprep.subr.mxu0 0.0
        %1118 = vmatpush1.msra.mxu0 0.0
        %1119 = vmatprep.subr.mxu0 0.0
        %1120 = vmatpush1.msra.mxu0 0.0
        %1121 = vmatprep.subr.mxu0 0.0
        %1122 = vmatpush1.msra.mxu0 0.0
        %1123 = vmatprep.subr.mxu0 0.0
        %1124 = vmatpush1.msra.mxu0 0.0
        %1125 = vmatprep.subr.mxu0 0.0
        %1126 = vmatpush1.msra.mxu0 0.0
        %1127 = vmatprep.subr.mxu0 0.0
        %1128 = vmatpush1.msra.mxu0 0.0
        %1129 = vmatprep.subr.mxu0 0.0
        %1130 = vmatpush1.msra.mxu0 0.0
        %1131 = vmatprep.subr.mxu0 0.0
        %1132 = vmatpush1.msra.mxu0 0.0
        %1133 = vmatprep.subr.mxu0 0.0
        %1134 = vmatpush1.msra.mxu0 0.0
        %1135 = vmatprep.subr.mxu0 0.0
        %1136 = vmatpush1.msra.mxu0 0.0
        %1137 = vmatprep.mubr.f32.mxu0 0.0
        %1138 = vmatmul.mubr.f32.gmra.mrb[0].mxu0 %v1071
        %v1139 = vpop.f32.mrb[0].mxu0
        %v1140 = vadd.f32 0.0, %v1139
        %v1141 = vpop.f32.mrb[0].mxu0
        %1142 = vdwg.mxu0
        %1143 = vrot.lane.b32.xlu0 %v884, 120
        %v1144 = vpop.permute.xlu0 %1143
        %1145 = vrot.lane.b32.xlu0 %v898, 88
        %v1146 = vpop.permute.xlu0 %1145
        %v1147 = vsel %vm990, %v1144, 0
        %v1149 = vsel %vm990, %v1146, 0
        %1151 = vmatprep.subr.mxu0 0.0
        %1152 = vmatpush1.xpose.msra.mxu0 %v1149
        %1153 = vmatprep.subr.mxu0 0.0
        %1154 = vmatpush1.xpose.msra.mxu0 0.0
        %1155 = vmatprep.subr.mxu0 0.0
        %1156 = vmatpush1.xpose.msra.mxu0 0.0
        %1157 = vmatprep.subr.mxu0 0.0
        %1158 = vmatpush1.xpose.msra.mxu0 0.0
        %1159 = vmatprep.subr.mxu0 0.0
        %1160 = vmatpush1.xpose.msra.mxu0 0.0
        %1161 = vmatprep.subr.mxu0 0.0
        %1162 = vmatpush1.xpose.msra.mxu0 0.0
        %1163 = vmatprep.subr.mxu0 0.0
        %1164 = vmatpush1.xpose.msra.mxu0 0.0
        %1165 = vmatprep.subr.mxu0 0.0
        %1166 = vmatpush1.xpose.msra.mxu0 0.0
        %1167 = vmatprep.subr.mxu0 0.0
        %1168 = vmatpush1.xpose.msra.mxu0 0.0
        %1169 = vmatprep.subr.mxu0 0.0
        %1170 = vmatpush1.xpose.msra.mxu0 0.0
        %1171 = vmatprep.subr.mxu0 0.0
        %1172 = vmatpush1.xpose.msra.mxu0 0.0
        %1173 = vmatprep.subr.mxu0 0.0
        %1174 = vmatpush1.xpose.msra.mxu0 0.0
        %1175 = vmatprep.subr.mxu0 0.0
        %1176 = vmatpush1.xpose.msra.mxu0 0.0
        %1177 = vmatprep.subr.mxu0 0.0
        %1178 = vmatpush1.xpose.msra.mxu0 0.0
        %1179 = vmatprep.subr.mxu0 0.0
        %1180 = vmatpush1.xpose.msra.mxu0 0.0
        %1181 = vmatprep.subr.mxu0 0.0
        %1182 = vmatpush1.xpose.msra.mxu0 0.0
        %1183 = vmatprep.subr.mxu0 0.0
        %1184 = vmatpush1.xpose.msra.mxu0 0.0
        %1185 = vmatprep.subr.mxu0 0.0
        %1186 = vmatpush1.xpose.msra.mxu0 0.0
        %1187 = vmatprep.subr.mxu0 0.0
        %1188 = vmatpush1.xpose.msra.mxu0 0.0
        %1189 = vmatprep.subr.mxu0 0.0
        %1190 = vmatpush1.xpose.msra.mxu0 0.0
        %1191 = vmatprep.subr.mxu0 0.0
        %1192 = vmatpush1.xpose.msra.mxu0 0.0
        %1193 = vmatprep.subr.mxu0 0.0
        %1194 = vmatpush1.xpose.msra.mxu0 0.0
        %1195 = vmatprep.subr.mxu0 0.0
        %1196 = vmatpush1.xpose.msra.mxu0 0.0
        %1197 = vmatprep.subr.mxu0 0.0
        %1198 = vmatpush1.xpose.msra.mxu0 0.0
        %1199 = vmatprep.subr.mxu0 0.0
        %1200 = vmatpush1.xpose.msra.mxu0 0.0
        %1201 = vmatprep.subr.mxu0 0.0
        %1202 = vmatpush1.xpose.msra.mxu0 0.0
        %1203 = vmatprep.subr.mxu0 0.0
        %1204 = vmatpush1.xpose.msra.mxu0 0.0
        %1205 = vmatprep.subr.mxu0 0.0
        %1206 = vmatpush1.xpose.msra.mxu0 0.0
        %1207 = vmatprep.subr.mxu0 0.0
        %1208 = vmatpush1.xpose.msra.mxu0 0.0
        %1209 = vmatprep.subr.mxu0 0.0
        %1210 = vmatpush1.xpose.msra.mxu0 0.0
        %1211 = vmatprep.subr.mxu0 0.0
        %1212 = vmatpush1.xpose.msra.mxu0 0.0
        %1213 = vmatprep.subr.mxu0 0.0
        %1214 = vmatpush1.xpose.msra.mxu0 0.0
        %1215 = vmatprep.mubr.f32.mxu0 0.0
        %1216 = vmatmul.mubr.f32.gmra.mrb[0].mxu0 %v1147
        %v1217 = vpop.f32.mrb[0].mxu0
        %v1218 = vadd.f32 0.0, %v1217
        %v1219 = vpop.f32.mrb[0].mxu0
        %1220 = vdwg.mxu0
        %1221 = vrot.lane.b32.xlu0 %v542, 56
        %v1222 = vpop.permute.xlu0 %1221
        %v1225 = vsel %vm990, %v1218, 0
        %1227 = vmatprep.subr.mxu0 0.0
        %1228 = vmatpush1.msra.mxu0 %v1222
        %1229 = vmatprep.subr.mxu0 0.0
        %1230 = vmatpush1.msra.mxu0 0.0
        %1231 = vmatprep.subr.mxu0 0.0
        %1232 = vmatpush1.msra.mxu0 0.0
        %1233 = vmatprep.subr.mxu0 0.0
        %1234 = vmatpush1.msra.mxu0 0.0
        %1235 = vmatprep.subr.mxu0 0.0
        %1236 = vmatpush1.msra.mxu0 0.0
        %1237 = vmatprep.subr.mxu0 0.0
        %1238 = vmatpush1.msra.mxu0 0.0
        %1239 = vmatprep.subr.mxu0 0.0
        %1240 = vmatpush1.msra.mxu0 0.0
        %1241 = vmatprep.subr.mxu0 0.0
        %1242 = vmatpush1.msra.mxu0 0.0
        %1243 = vmatprep.subr.mxu0 0.0
        %1244 = vmatpush1.msra.mxu0 0.0
        %1245 = vmatprep.subr.mxu0 0.0
        %1246 = vmatpush1.msra.mxu0 0.0
        %1247 = vmatprep.subr.mxu0 0.0
        %1248 = vmatpush1.msra.mxu0 0.0
        %1249 = vmatprep.subr.mxu0 0.0
        %1250 = vmatpush1.msra.mxu0 0.0
        %1251 = vmatprep.subr.mxu0 0.0
        %1252 = vmatpush1.msra.mxu0 0.0
        %1253 = vmatprep.subr.mxu0 0.0
        %1254 = vmatpush1.msra.mxu0 0.0
        %1255 = vmatprep.subr.mxu0 0.0
        %1256 = vmatpush1.msra.mxu0 0.0
        %1257 = vmatprep.subr.mxu0 0.0
        %1258 = vmatpush1.msra.mxu0 0.0
        %1259 = vmatprep.subr.mxu0 0.0
        %1260 = vmatpush1.msra.mxu0 0.0
        %1261 = vmatprep.subr.mxu0 0.0
        %1262 = vmatpush1.msra.mxu0 0.0
        %1263 = vmatprep.subr.mxu0 0.0
        %1264 = vmatpush1.msra.mxu0 0.0
        %1265 = vmatprep.subr.mxu0 0.0
        %1266 = vmatpush1.msra.mxu0 0.0
        %1267 = vmatprep.subr.mxu0 0.0
        %1268 = vmatpush1.msra.mxu0 0.0
        %1269 = vmatprep.subr.mxu0 0.0
        %1270 = vmatpush1.msra.mxu0 0.0
        %1271 = vmatprep.subr.mxu0 0.0
        %1272 = vmatpush1.msra.mxu0 0.0
        %1273 = vmatprep.subr.mxu0 0.0
        %1274 = vmatpush1.msra.mxu0 0.0
        %1275 = vmatprep.subr.mxu0 0.0
        %1276 = vmatpush1.msra.mxu0 0.0
        %1277 = vmatprep.subr.mxu0 0.0
        %1278 = vmatpush1.msra.mxu0 0.0
        %1279 = vmatprep.subr.mxu0 0.0
        %1280 = vmatpush1.msra.mxu0 0.0
        %1281 = vmatprep.subr.mxu0 0.0
        %1282 = vmatpush1.msra.mxu0 0.0
        %1283 = vmatprep.subr.mxu0 0.0
        %1284 = vmatpush1.msra.mxu0 0.0
        %1285 = vmatprep.subr.mxu0 0.0
        %1286 = vmatpush1.msra.mxu0 0.0
        %1287 = vmatprep.subr.mxu0 0.0
        %1288 = vmatpush1.msra.mxu0 0.0
        %1289 = vmatprep.subr.mxu0 0.0
        %1290 = vmatpush1.msra.mxu0 0.0
        %1291 = vmatprep.mubr.f32.mxu0 0.0
        %1292 = vmatmul.mubr.f32.gmra.mrb[0].mxu0 %v1225
        %v1293 = vpop.f32.mrb[0].mxu0
        %v1294 = vadd.f32 0.0, %v1293
        %v1295 = vpop.f32.mrb[0].mxu0
        %1296 = vdwg.mxu0
        %1297 = vrot.lane.b32.xlu0 %v884, 112
        %v1298 = vpop.permute.xlu0 %1297
        %1299 = vrot.lane.b32.xlu0 %v898, 80
        %v1300 = vpop.permute.xlu0 %1299
        %v1301 = vsel %vm990, %v1298, 0
        %v1303 = vsel %vm990, %v1300, 0
        %1305 = vmatprep.subr.mxu0 0.0
        %1306 = vmatpush1.xpose.msra.mxu0 %v1303
        %1307 = vmatprep.subr.mxu0 0.0
        %1308 = vmatpush1.xpose.msra.mxu0 0.0
        %1309 = vmatprep.subr.mxu0 0.0
        %1310 = vmatpush1.xpose.msra.mxu0 0.0
        %1311 = vmatprep.subr.mxu0 0.0
        %1312 = vmatpush1.xpose.msra.mxu0 0.0
        %1313 = vmatprep.subr.mxu0 0.0
        %1314 = vmatpush1.xpose.msra.mxu0 0.0
        %1315 = vmatprep.subr.mxu0 0.0
        %1316 = vmatpush1.xpose.msra.mxu0 0.0
        %1317 = vmatprep.subr.mxu0 0.0
        %1318 = vmatpush1.xpose.msra.mxu0 0.0
        %1319 = vmatprep.subr.mxu0 0.0
        %1320 = vmatpush1.xpose.msra.mxu0 0.0
        %1321 = vmatprep.subr.mxu0 0.0
        %1322 = vmatpush1.xpose.msra.mxu0 0.0
        %1323 = vmatprep.subr.mxu0 0.0
        %1324 = vmatpush1.xpose.msra.mxu0 0.0
        %1325 = vmatprep.subr.mxu0 0.0
        %1326 = vmatpush1.xpose.msra.mxu0 0.0
        %1327 = vmatprep.subr.mxu0 0.0
        %1328 = vmatpush1.xpose.msra.mxu0 0.0
        %1329 = vmatprep.subr.mxu0 0.0
        %1330 = vmatpush1.xpose.msra.mxu0 0.0
        %1331 = vmatprep.subr.mxu0 0.0
        %1332 = vmatpush1.xpose.msra.mxu0 0.0
        %1333 = vmatprep.subr.mxu0 0.0
        %1334 = vmatpush1.xpose.msra.mxu0 0.0
        %1335 = vmatprep.subr.mxu0 0.0
        %1336 = vmatpush1.xpose.msra.mxu0 0.0
        %1337 = vmatprep.subr.mxu0 0.0
        %1338 = vmatpush1.xpose.msra.mxu0 0.0
        %1339 = vmatprep.subr.mxu0 0.0
        %1340 = vmatpush1.xpose.msra.mxu0 0.0
        %1341 = vmatprep.subr.mxu0 0.0
        %1342 = vmatpush1.xpose.msra.mxu0 0.0
        %1343 = vmatprep.subr.mxu0 0.0
        %1344 = vmatpush1.xpose.msra.mxu0 0.0
        %1345 = vmatprep.subr.mxu0 0.0
        %1346 = vmatpush1.xpose.msra.mxu0 0.0
        %1347 = vmatprep.subr.mxu0 0.0
        %1348 = vmatpush1.xpose.msra.mxu0 0.0
        %1349 = vmatprep.subr.mxu0 0.0
        %1350 = vmatpush1.xpose.msra.mxu0 0.0
        %1351 = vmatprep.subr.mxu0 0.0
        %1352 = vmatpush1.xpose.msra.mxu0 0.0
        %1353 = vmatprep.subr.mxu0 0.0
        %1354 = vmatpush1.xpose.msra.mxu0 0.0
        %1355 = vmatprep.subr.mxu0 0.0
        %1356 = vmatpush1.xpose.msra.mxu0 0.0
        %1357 = vmatprep.subr.mxu0 0.0
        %1358 = vmatpush1.xpose.msra.mxu0 0.0
        %1359 = vmatprep.subr.mxu0 0.0
        %1360 = vmatpush1.xpose.msra.mxu0 0.0
        %1361 = vmatprep.subr.mxu0 0.0
        %1362 = vmatpush1.xpose.msra.mxu0 0.0
        %1363 = vmatprep.subr.mxu0 0.0
        %1364 = vmatpush1.xpose.msra.mxu0 0.0
        %1365 = vmatprep.subr.mxu0 0.0
        %1366 = vmatpush1.xpose.msra.mxu0 0.0
        %1367 = vmatprep.subr.mxu0 0.0
        %1368 = vmatpush1.xpose.msra.mxu0 0.0
        %1369 = vmatprep.mubr.f32.mxu0 0.0
        %1370 = vmatmul.mubr.f32.gmra.mrb[0].mxu0 %v1301
        %v1371 = vpop.f32.mrb[0].mxu0
        %v1372 = vadd.f32 0.0, %v1371
        %v1373 = vpop.f32.mrb[0].mxu0
        %1374 = vdwg.mxu0
        %1375 = vrot.lane.b32.xlu0 %v542, 48
        %v1376 = vpop.permute.xlu0 %1375
        %v1379 = vsel %vm990, %v1372, 0
        %1381 = vmatprep.subr.mxu0 0.0
        %1382 = vmatpush1.msra.mxu0 %v1376
        %1383 = vmatprep.subr.mxu0 0.0
        %1384 = vmatpush1.msra.mxu0 0.0
        %1385 = vmatprep.subr.mxu0 0.0
        %1386 = vmatpush1.msra.mxu0 0.0
        %1387 = vmatprep.subr.mxu0 0.0
        %1388 = vmatpush1.msra.mxu0 0.0
        %1389 = vmatprep.subr.mxu0 0.0
        %1390 = vmatpush1.msra.mxu0 0.0
        %1391 = vmatprep.subr.mxu0 0.0
        %1392 = vmatpush1.msra.mxu0 0.0
        %1393 = vmatprep.subr.mxu0 0.0
        %1394 = vmatpush1.msra.mxu0 0.0
        %1395 = vmatprep.subr.mxu0 0.0
        %1396 = vmatpush1.msra.mxu0 0.0
        %1397 = vmatprep.subr.mxu0 0.0
        %1398 = vmatpush1.msra.mxu0 0.0
        %1399 = vmatprep.subr.mxu0 0.0
        %1400 = vmatpush1.msra.mxu0 0.0
        %1401 = vmatprep.subr.mxu0 0.0
        %1402 = vmatpush1.msra.mxu0 0.0
        %1403 = vmatprep.subr.mxu0 0.0
        %1404 = vmatpush1.msra.mxu0 0.0
        %1405 = vmatprep.subr.mxu0 0.0
        %1406 = vmatpush1.msra.mxu0 0.0
        %1407 = vmatprep.subr.mxu0 0.0
        %1408 = vmatpush1.msra.mxu0 0.0
        %1409 = vmatprep.subr.mxu0 0.0
        %1410 = vmatpush1.msra.mxu0 0.0
        %1411 = vmatprep.subr.mxu0 0.0
        %1412 = vmatpush1.msra.mxu0 0.0
        %1413 = vmatprep.subr.mxu0 0.0
        %1414 = vmatpush1.msra.mxu0 0.0
        %1415 = vmatprep.subr.mxu0 0.0
        %1416 = vmatpush1.msra.mxu0 0.0
        %1417 = vmatprep.subr.mxu0 0.0
        %1418 = vmatpush1.msra.mxu0 0.0
        %1419 = vmatprep.subr.mxu0 0.0
        %1420 = vmatpush1.msra.mxu0 0.0
        %1421 = vmatprep.subr.mxu0 0.0
        %1422 = vmatpush1.msra.mxu0 0.0
        %1423 = vmatprep.subr.mxu0 0.0
        %1424 = vmatpush1.msra.mxu0 0.0
        %1425 = vmatprep.subr.mxu0 0.0
        %1426 = vmatpush1.msra.mxu0 0.0
        %1427 = vmatprep.subr.mxu0 0.0
        %1428 = vmatpush1.msra.mxu0 0.0
        %1429 = vmatprep.subr.mxu0 0.0
        %1430 = vmatpush1.msra.mxu0 0.0
        %1431 = vmatprep.subr.mxu0 0.0
        %1432 = vmatpush1.msra.mxu0 0.0
        %1433 = vmatprep.subr.mxu0 0.0
        %1434 = vmatpush1.msra.mxu0 0.0
        %1435 = vmatprep.subr.mxu0 0.0
        %1436 = vmatpush1.msra.mxu0 0.0
        %1437 = vmatprep.subr.mxu0 0.0
        %1438 = vmatpush1.msra.mxu0 0.0
        %1439 = vmatprep.subr.mxu0 0.0
        %1440 = vmatpush1.msra.mxu0 0.0
        %1441 = vmatprep.subr.mxu0 0.0
        %1442 = vmatpush1.msra.mxu0 0.0
        %1443 = vmatprep.subr.mxu0 0.0
        %1444 = vmatpush1.msra.mxu0 0.0
        %1445 = vmatprep.mubr.f32.mxu0 0.0
        %1446 = vmatmul.mubr.f32.gmra.mrb[0].mxu0 %v1379
        %v1447 = vpop.f32.mrb[0].mxu0
        %v1448 = vadd.f32 0.0, %v1447
        %v1449 = vpop.f32.mrb[0].mxu0
        %1450 = vdwg.mxu0
        %1451 = vrot.lane.b32.xlu0 %v884, 104
        %v1452 = vpop.permute.xlu0 %1451
        %1453 = vrot.lane.b32.xlu0 %v898, 72
        %v1454 = vpop.permute.xlu0 %1453
        %v1455 = vsel %vm990, %v1452, 0
        %v1457 = vsel %vm990, %v1454, 0
        %1459 = vmatprep.subr.mxu0 0.0
        %1460 = vmatpush1.xpose.msra.mxu0 %v1457
        %1461 = vmatprep.subr.mxu0 0.0
        %1462 = vmatpush1.xpose.msra.mxu0 0.0
        %1463 = vmatprep.subr.mxu0 0.0
        %1464 = vmatpush1.xpose.msra.mxu0 0.0
        %1465 = vmatprep.subr.mxu0 0.0
        %1466 = vmatpush1.xpose.msra.mxu0 0.0
        %1467 = vmatprep.subr.mxu0 0.0
        %1468 = vmatpush1.xpose.msra.mxu0 0.0
        %1469 = vmatprep.subr.mxu0 0.0
        %1470 = vmatpush1.xpose.msra.mxu0 0.0
        %1471 = vmatprep.subr.mxu0 0.0
        %1472 = vmatpush1.xpose.msra.mxu0 0.0
        %1473 = vmatprep.subr.mxu0 0.0
        %1474 = vmatpush1.xpose.msra.mxu0 0.0
        %1475 = vmatprep.subr.mxu0 0.0
        %1476 = vmatpush1.xpose.msra.mxu0 0.0
        %1477 = vmatprep.subr.mxu0 0.0
        %1478 = vmatpush1.xpose.msra.mxu0 0.0
        %1479 = vmatprep.subr.mxu0 0.0
        %1480 = vmatpush1.xpose.msra.mxu0 0.0
        %1481 = vmatprep.subr.mxu0 0.0
        %1482 = vmatpush1.xpose.msra.mxu0 0.0
        %1483 = vmatprep.subr.mxu0 0.0
        %1484 = vmatpush1.xpose.msra.mxu0 0.0
        %1485 = vmatprep.subr.mxu0 0.0
        %1486 = vmatpush1.xpose.msra.mxu0 0.0
        %1487 = vmatprep.subr.mxu0 0.0
        %1488 = vmatpush1.xpose.msra.mxu0 0.0
        %1489 = vmatprep.subr.mxu0 0.0
        %1490 = vmatpush1.xpose.msra.mxu0 0.0
        %1491 = vmatprep.subr.mxu0 0.0
        %1492 = vmatpush1.xpose.msra.mxu0 0.0
        %1493 = vmatprep.subr.mxu0 0.0
        %1494 = vmatpush1.xpose.msra.mxu0 0.0
        %1495 = vmatprep.subr.mxu0 0.0
        %1496 = vmatpush1.xpose.msra.mxu0 0.0
        %1497 = vmatprep.subr.mxu0 0.0
        %1498 = vmatpush1.xpose.msra.mxu0 0.0
        %1499 = vmatprep.subr.mxu0 0.0
        %1500 = vmatpush1.xpose.msra.mxu0 0.0
        %1501 = vmatprep.subr.mxu0 0.0
        %1502 = vmatpush1.xpose.msra.mxu0 0.0
        %1503 = vmatprep.subr.mxu0 0.0
        %1504 = vmatpush1.xpose.msra.mxu0 0.0
        %1505 = vmatprep.subr.mxu0 0.0
        %1506 = vmatpush1.xpose.msra.mxu0 0.0
        %1507 = vmatprep.subr.mxu0 0.0
        %1508 = vmatpush1.xpose.msra.mxu0 0.0
        %1509 = vmatprep.subr.mxu0 0.0
        %1510 = vmatpush1.xpose.msra.mxu0 0.0
        %1511 = vmatprep.subr.mxu0 0.0
        %1512 = vmatpush1.xpose.msra.mxu0 0.0
        %1513 = vmatprep.subr.mxu0 0.0
        %1514 = vmatpush1.xpose.msra.mxu0 0.0
        %1515 = vmatprep.subr.mxu0 0.0
        %1516 = vmatpush1.xpose.msra.mxu0 0.0
        %1517 = vmatprep.subr.mxu0 0.0
        %1518 = vmatpush1.xpose.msra.mxu0 0.0
        %1519 = vmatprep.subr.mxu0 0.0
        %1520 = vmatpush1.xpose.msra.mxu0 0.0
        %1521 = vmatprep.subr.mxu0 0.0
        %1522 = vmatpush1.xpose.msra.mxu0 0.0
        %1523 = vmatprep.mubr.f32.mxu0 0.0
        %1524 = vmatmul.mubr.f32.gmra.mrb[0].mxu0 %v1455
        %v1525 = vpop.f32.mrb[0].mxu0
        %v1526 = vadd.f32 0.0, %v1525
        %v1527 = vpop.f32.mrb[0].mxu0
        %1528 = vdwg.mxu0
        %1529 = vrot.lane.b32.xlu0 %v542, 40
        %v1530 = vpop.permute.xlu0 %1529
        %v1533 = vsel %vm990, %v1526, 0
        %1535 = vmatprep.subr.mxu0 0.0
        %1536 = vmatpush1.msra.mxu0 %v1530
        %1537 = vmatprep.subr.mxu0 0.0
        %1538 = vmatpush1.msra.mxu0 0.0
        %1539 = vmatprep.subr.mxu0 0.0
        %1540 = vmatpush1.msra.mxu0 0.0
        %1541 = vmatprep.subr.mxu0 0.0
        %1542 = vmatpush1.msra.mxu0 0.0
        %1543 = vmatprep.subr.mxu0 0.0
        %1544 = vmatpush1.msra.mxu0 0.0
        %1545 = vmatprep.subr.mxu0 0.0
        %1546 = vmatpush1.msra.mxu0 0.0
        %1547 = vmatprep.subr.mxu0 0.0
        %1548 = vmatpush1.msra.mxu0 0.0
        %1549 = vmatprep.subr.mxu0 0.0
        %1550 = vmatpush1.msra.mxu0 0.0
        %1551 = vmatprep.subr.mxu0 0.0
        %1552 = vmatpush1.msra.mxu0 0.0
        %1553 = vmatprep.subr.mxu0 0.0
        %1554 = vmatpush1.msra.mxu0 0.0
        %1555 = vmatprep.subr.mxu0 0.0
        %1556 = vmatpush1.msra.mxu0 0.0
        %1557 = vmatprep.subr.mxu0 0.0
        %1558 = vmatpush1.msra.mxu0 0.0
        %1559 = vmatprep.subr.mxu0 0.0
        %1560 = vmatpush1.msra.mxu0 0.0
        %1561 = vmatprep.subr.mxu0 0.0
        %1562 = vmatpush1.msra.mxu0 0.0
        %1563 = vmatprep.subr.mxu0 0.0
        %1564 = vmatpush1.msra.mxu0 0.0
        %1565 = vmatprep.subr.mxu0 0.0
        %1566 = vmatpush1.msra.mxu0 0.0
        %1567 = vmatprep.subr.mxu0 0.0
        %1568 = vmatpush1.msra.mxu0 0.0
        %1569 = vmatprep.subr.mxu0 0.0
        %1570 = vmatpush1.msra.mxu0 0.0
        %1571 = vmatprep.subr.mxu0 0.0
        %1572 = vmatpush1.msra.mxu0 0.0
        %1573 = vmatprep.subr.mxu0 0.0
        %1574 = vmatpush1.msra.mxu0 0.0
        %1575 = vmatprep.subr.mxu0 0.0
        %1576 = vmatpush1.msra.mxu0 0.0
        %1577 = vmatprep.subr.mxu0 0.0
        %1578 = vmatpush1.msra.mxu0 0.0
        %1579 = vmatprep.subr.mxu0 0.0
        %1580 = vmatpush1.msra.mxu0 0.0
        %1581 = vmatprep.subr.mxu0 0.0
        %1582 = vmatpush1.msra.mxu0 0.0
        %1583 = vmatprep.subr.mxu0 0.0
        %1584 = vmatpush1.msra.mxu0 0.0
        %1585 = vmatprep.subr.mxu0 0.0
        %1586 = vmatpush1.msra.mxu0 0.0
        %1587 = vmatprep.subr.mxu0 0.0
        %1588 = vmatpush1.msra.mxu0 0.0
        %1589 = vmatprep.subr.mxu0 0.0
        %1590 = vmatpush1.msra.mxu0 0.0
        %1591 = vmatprep.subr.mxu0 0.0
        %1592 = vmatpush1.msra.mxu0 0.0
        %1593 = vmatprep.subr.mxu0 0.0
        %1594 = vmatpush1.msra.mxu0 0.0
        %1595 = vmatprep.subr.mxu0 0.0
        %1596 = vmatpush1.msra.mxu0 0.0
        %1597 = vmatprep.subr.mxu0 0.0
        %1598 = vmatpush1.msra.mxu0 0.0
        %1599 = vmatprep.mubr.f32.mxu0 0.0
        %1600 = vmatmul.mubr.f32.gmra.mrb[0].mxu0 %v1533
        %v1601 = vpop.f32.mrb[0].mxu0
        %v1602 = vadd.f32 0.0, %v1601
        %v1603 = vpop.f32.mrb[0].mxu0
        %1604 = vdwg.mxu0
        %1606 = vrot.lane.b32.xlu0 %v1294, 8
        %v1607 = vpop.permute.xlu0 %1606
        %1610 = vrot.lane.b32.xlu0 %v1448, 16
        %v1611 = vpop.permute.xlu0 %1610
        %1614 = vrot.lane.b32.xlu0 %v1602, 24
        %v1615 = vpop.permute.xlu0 %1614
        %v1617 = vsel %vm990, %v1140, %v1607
        %vm1618 = vcmask 130048
        %v1619 = vsel %vm1618, %v1617, %v1611
        %vm1620 = vcmask 195584
        %v1621 = vsel %vm1620, %v1619, %v1615
        %v1622 = vmul.f32 %v1621, %v986
        %v1623 = vld [vmem:[#allocation7] sm:$0xff]
        %v1624 = vlaneseq
        %v1625 = vshrl.u32 %v1624, 7
        %v1626 = vsub.s32 0, %v1625
        %v1627 = vrot.slane %v542, %v1626
        %1629 = vrot.lane.b32.xlu0 %v1623, 64
        %v1630 = vpop.permute.xlu0 %1629
        %v1632 = vmul.f32 %v1627, %v1630
        %v1633 = vadd.f32 %v1632, 0.0
        %s1634 = scalar_lea.vmem [#allocation7], 8
        %v1635 = vld [vmem:[%s1634] sm:$0xff]
        %v1636 = vlaneseq
        %v1637 = vshrl.u32 %v1636, 7
        %v1638 = vsub.s32 1, %v1637
        %v1639 = vrot.slane %v542, %v1638
        %1641 = vrot.lane.b32.xlu0 %v1635, 64
        %v1642 = vpop.permute.xlu0 %1641
        %v1644 = vmul.f32 %v1639, %v1642
        %v1645 = vadd.f32 %v1633, %v1644
        %s1646 = scalar_lea.vmem [#allocation7], 16
        %v1647 = vld [vmem:[%s1646] sm:$0xff]
        %v1648 = vlaneseq
        %v1649 = vshrl.u32 %v1648, 7
        %v1650 = vsub.s32 2, %v1649
        %v1651 = vrot.slane %v542, %v1650
        %1653 = vrot.lane.b32.xlu0 %v1647, 64
        %v1654 = vpop.permute.xlu0 %1653
        %v1656 = vmul.f32 %v1651, %v1654
        %v1657 = vadd.f32 %v1645, %v1656
        %s1658 = scalar_lea.vmem [#allocation7], 24
        %v1659 = vld [vmem:[%s1658] sm:$0xff]
        %v1660 = vlaneseq
        %v1661 = vshrl.u32 %v1660, 7
        %v1662 = vsub.s32 3, %v1661
        %v1663 = vrot.slane %v542, %v1662
        %1665 = vrot.lane.b32.xlu0 %v1659, 64
        %v1666 = vpop.permute.xlu0 %1665
        %v1668 = vmul.f32 %v1663, %v1666
        %v1669 = vadd.f32 %v1657, %v1668
        %s1670 = scalar_lea.vmem [#allocation7], 32
        %v1671 = vld [vmem:[%s1670] sm:$0xff]
        %v1672 = vlaneseq
        %v1673 = vshrl.u32 %v1672, 7
        %v1674 = vsub.s32 4, %v1673
        %v1675 = vrot.slane %v542, %v1674
        %1677 = vrot.lane.b32.xlu0 %v1671, 64
        %v1678 = vpop.permute.xlu0 %1677
        %v1680 = vmul.f32 %v1675, %v1678
        %v1681 = vadd.f32 %v1669, %v1680
        %s1682 = scalar_lea.vmem [#allocation7], 40
        %v1683 = vld [vmem:[%s1682] sm:$0xff]
        %v1684 = vlaneseq
        %v1685 = vshrl.u32 %v1684, 7
        %v1686 = vsub.s32 5, %v1685
        %v1687 = vrot.slane %v542, %v1686
        %1689 = vrot.lane.b32.xlu0 %v1683, 64
        %v1690 = vpop.permute.xlu0 %1689
        %v1692 = vmul.f32 %v1687, %v1690
        %v1693 = vadd.f32 %v1681, %v1692
        %s1694 = scalar_lea.vmem [#allocation7], 48
        %v1695 = vld [vmem:[%s1694] sm:$0xff]
        %v1696 = vlaneseq
        %v1697 = vshrl.u32 %v1696, 7
        %v1698 = vsub.s32 6, %v1697
        %v1699 = vrot.slane %v542, %v1698
        %1701 = vrot.lane.b32.xlu0 %v1695, 64
        %v1702 = vpop.permute.xlu0 %1701
        %v1704 = vmul.f32 %v1699, %v1702
        %v1705 = vadd.f32 %v1693, %v1704
        %s1706 = scalar_lea.vmem [#allocation7], 56
        %v1707 = vld [vmem:[%s1706] sm:$0xff]
        %v1708 = vlaneseq
        %v1709 = vshrl.u32 %v1708, 7
        %v1710 = vsub.s32 7, %v1709
        %v1711 = vrot.slane %v542, %v1710
        %1713 = vrot.lane.b32.xlu0 %v1707, 64
        %v1714 = vpop.permute.xlu0 %1713
        %v1716 = vmul.f32 %v1711, %v1714
        %v1717 = vadd.f32 %v1705, %v1716
        %v1718 = vld [vmem:[%s6] sm:$0x1]
        %v1720 = vlaneseq
        %v1721 = vshrl.u32 %v1720, 7
        %v1722 = vsub.s32 0, %v1721
        %v1723 = vrot.slane %v1718, %v1722
        %1724 = vrot.lane.b32.xlu0 %v1723, 64
        %v1725 = vpop.permute.xlu0 %1724
        %v1727 = vadd.f32 %v1717, %v1725
        %1729 = vrot.lane.b32.xlu0 %v1727, 64
        %v1730 = vpop.permute.xlu0 %1729
        %v1732 = vadd.f32 %v1622, %v1730
        %v1733 = vpack.c.bf16 %v1732, %v1732
        %v1734 = vld [vmem:[#allocation8] sm:$0xf]
        %v1735 = vld [vmem:[#allocation8 + $0x4] sm:$0xf]
        %v1736 = vld [vmem:[#allocation8 + $0x8] sm:$0xf]
        %v1737 = vld [vmem:[#allocation8 + $0xc] sm:$0xf]
        %v1738 = vld [vmem:[%s8] sm:$0x1]
        %v1740 = vlaneseq
        %v1741 = vshrl.u32 %v1740, 7
        %v1742 = vsub.s32 0, %v1741
        %v1743 = vrot.slane %v1738, %v1742
        %v1749 = vunpack.c.l.b16 %v1734
        %v1750 = vunpack.c.l.b16 %v1735
        %v1751 = vunpack.c.l.b16 %v1736
        %v1752 = vunpack.c.l.b16 %v1737
        %v1753 = vpack.c.b16 %v1750, %v1749
        %v1754 = vpack.c.b16 %v1752, %v1751
        %v1758 = vsel %vm503, %v1733, 0
        %1760 = vmatprep.subr.bf16.mxu0 0
        %1761 = vmatpush1.bf16.msra.mxu0 %v1753
        %1762 = vmatprep.subr.bf16.mxu0 0
        %1763 = vmatpush1.bf16.msra.mxu0 %v1754
        %1764 = vmatprep.subr.bf16.mxu0 0
        %1765 = vmatpush1.bf16.msra.mxu0 0
        %1766 = vmatprep.subr.bf16.mxu0 0
        %1767 = vmatpush1.bf16.msra.mxu0 0
        %1768 = vmatprep.subr.bf16.mxu0 0
        %1769 = vmatpush1.bf16.msra.mxu0 0
        %1770 = vmatprep.subr.bf16.mxu0 0
        %1771 = vmatpush1.bf16.msra.mxu0 0
        %1772 = vmatprep.subr.bf16.mxu0 0
        %1773 = vmatpush1.bf16.msra.mxu0 0
        %1774 = vmatprep.subr.bf16.mxu0 0
        %1775 = vmatpush1.bf16.msra.mxu0 0
        %1776 = vmatprep.subr.bf16.mxu0 0
        %1777 = vmatpush1.bf16.msra.mxu0 0
        %1778 = vmatprep.subr.bf16.mxu0 0
        %1779 = vmatpush1.bf16.msra.mxu0 0
        %1780 = vmatprep.subr.bf16.mxu0 0
        %1781 = vmatpush1.bf16.msra.mxu0 0
        %1782 = vmatprep.subr.bf16.mxu0 0
        %1783 = vmatpush1.bf16.msra.mxu0 0
        %1784 = vmatprep.subr.bf16.mxu0 0
        %1785 = vmatpush1.bf16.msra.mxu0 0
        %1786 = vmatprep.subr.bf16.mxu0 0
        %1787 = vmatpush1.bf16.msra.mxu0 0
        %1788 = vmatprep.subr.bf16.mxu0 0
        %1789 = vmatpush1.bf16.msra.mxu0 0
        %1790 = vmatprep.subr.bf16.mxu0 0
        %1791 = vmatpush1.bf16.msra.mxu0 0
        %1792 = vmatprep.mubr.bf16.mxu0 0
        %1793 = vmatmul.mubr.bf16.gmra.mrb[0].mxu0 %v1758
        %v1794 = vpop.f32.mrb[0].mxu0
        %v1795 = vadd.f32 %v1743, %v1794
        %v1796 = vpop.f32.mrb[0].mxu0
        %v1797 = vpop.f32.mrb[0].mxu0
        %v1798 = vpop.f32.mrb[0].mxu0
        %1799 = vdwg.mxu0
        %vm1800 = vcmask 254976
        %1801 = vst.msk [vmem:[%s462] sm:$0x3] %vm1800, %v1795
        %s1802 = scalar_lea.vmem %s462, 2 [#allocation10]
        %vm1803 = vcmask 257026
        %1804 = vst.msk [vmem:[%s1802 - $0x2] sm:$0xc] %vm1803, %v1795
        %s1805 = scalar_lea.vmem %s462, 4 [#allocation10]
        %vm1806 = vcmask 259076
        %1807 = vst.msk [vmem:[%s1805 - $0x4] sm:$0x30] %vm1806, %v1795
        %s1808 = scalar_lea.vmem %s462, 6 [#allocation10]
        %vm1809 = vcmask 261126
        %1810 = vst.msk [vmem:[%s1808 - $0x6] sm:$0xc0] %vm1809, %v1795
        %s1811 = sand.u32 %s268, 1
        %s1812 = scalar_lea.sflag [#allocation4], %s1811
        %s1813 = sand.u32 %s268, 1
        %s1814 = smul.addr %s1813, 8
        %s1815 = scalar_lea.vmem [#allocation10], %s1814
        // Predicated region
        $region73: #{_lambda_.1} parent=55 // pred_check
          %p1816 = pneg %p278
        $region74: #{_lambda_.1} parent=55 // pred_check_branch
          %1818 = sbr.rel (%p1816) target = $region76
        $region75: #{_lambda_.1} parent=55 // pred_region
          #allocation14 [shape = 'u32[6]{0}', space=smem, size = 0x18, scoped, tag = 'DMA stride descriptor']
          %s1820 = ssub.s32 128, 128
          %1821 = vsyncadd %s1812, %s1820
          %s1822 = smul.addr %s36, 4
          %s1823 = sadd.s32 %s37, %s1822
          %s1824 = smul.addr %s35, 16
          %s1825 = sadd.s32 %s1823, %s1824
          %s1826 = smul.addr %s34, 32
          %s1827 = sadd.s32 %s1825, %s1826
          %s1828 = smul.addr %s1827, 32
          %s1829 = scalar_lea.hbm %s9, %s1828
          %s1831 = sshll.u32 1, 14
          %s1832 = sxor.u32 4294967295, %s1831
          %s1835 = sshll.u32 7, 18
          %s1836 = sxor.u32 4294967295, %s1835
          %s1837 = sand.u32 0, %s1836
          %s1839 = sor.u32 %s1837, 0
          %s1841 = sshll.u32 3, 24
          %s1842 = sxor.u32 4294967295, %s1841
          %s1843 = sand.u32 %s1839, %s1842
          %s1845 = sor.u32 %s1843, 0
          %s1846 = sshll.u32 %s1815, 4
          %s1847 = int_to_ptr.vmem [resolvable:$true] %s1846
          %1853 = sst [smem:[#allocation14]] 64
          %s1854 = scalar_lea.smem [#allocation14], 1
          %1855 = sst [smem:[%s1854]] 256
          %s1856 = scalar_lea.smem [#allocation14], 2
          %1857 = sst [smem:[%s1856]] 2
          %s1858 = scalar_lea.smem [#allocation14], 3
          %1859 = sst [smem:[%s1858]] 32
          %s1860 = scalar_lea.smem [#allocation14], 4
          %1861 = sst [smem:[%s1860]] 64
          %s1862 = scalar_lea.smem [#allocation14], 5
          %1863 = sst [smem:[%s1862]] 2
          %1865 = dma.general %s1847, 128, %s1829, %s1812, [#allocation13], [#allocation14], %s1845, 0
        $region76: #{_lambda_.1} parent=55 // pred_fallthru
          _
      $region56: #{_lambda_.1} parent=5 // pred_fallthru
        _
      %p1866 = scmp.le.s32.totalorder 2, %s23
      // Predicated region
      $region77: #{_lambda_.1} parent=5 // pred_check
        %p1867 = pneg %p1866
      $region78: #{_lambda_.1} parent=5 // pred_check_branch
        %1869 = sbr.rel (%p1867) target = $region80
      $region79: #{_lambda_.1} parent=5 // pred_region
        %s1870 = ssub.s32 %s23, 2
        // Predicated region
        $region81: #{_lambda_.1} parent=79 // pred_check
          %p1871 = pneg %p284
        $region82: #{_lambda_.1} parent=79 // pred_check_branch
          %1873 = sbr.rel (%p1871) target = $region84
        $region83: #{_lambda_.1} parent=79 // pred_region
          %s1874 = sand.u32 %s269, 1
          %s1875 = scalar_lea.sflag [#allocation4], %s1874
          %s1876 = sand.u32 %s269, 1
          %s1877 = smul.addr %s1876, 8
          %s1878 = scalar_lea.vmem [#allocation10], %s1877
          %1879 = dma.done %s1875, 128
        $region84: #{_lambda_.1} parent=79 // pred_fallthru
          _
      $region80: #{_lambda_.1} parent=5 // pred_fallthru
        _
    $region6: #{_lambda_.1} parent=1 // loop_footer
      %s27 = sadd.s32 1, %s23
    $region7: #{_lambda_.1} parent=1 // loop_footer_branch
      %22 = sbr.rel target = $region3
    $region8: #{_lambda_.1} parent=1 // loop_exit
      _
    %1880 = vsyncpa [#allocation3], 1
    %s1881 = scalar_lea.sflag [#allocation3], 1
    %1882 = vsyncpa %s1881, 1
    %1883 = vsyncpa [#allocation6], 1
    %1884 = vsyncpa [#allocation9], 1
    %1885 = vsyncpa [#allocation4], 1
    %s1886 = scalar_lea.sflag [#allocation4], 1
    %1887 = vsyncpa %s1886, 1

</llo_original>
